<compile_context>
chip_gen: v7x
topology: tpu7x:2x2x1
jax: 0.10.0
libtpu: 0.0.40
codegen_flags: <defaults>
</compile_context>

<pallas_src>
import functools

import jax
import jax.numpy as jnp
from jax.experimental import pallas as pl
from jax.experimental.pallas import tpu as pltpu

EPS = 1e-5
VMEM_LIMIT = 32 * 1024 * 1024      # explicit scoped-VMEM budget (fits v5e/v6e/v7x)
LANE_TILE_TARGET = 2048            # target spatial (lane-axis) tile


def _spatial_tile(hw: int, target: int = LANE_TILE_TARGET) -> int:
    """Largest lane-dim tile that is a multiple of 128 and divides hw, else hw."""
    if hw <= target:
        return hw
    t = (target // 128) * 128
    while t >= 128:
        if hw % t == 0:
            return t
        t -= 128
    return hw  # TODO(synk): awkward spatial sizes fall back to one tile per sample.


def _compiler_params(n_axes: int) -> pltpu.CompilerParams:
    return pltpu.CompilerParams(
        dimension_semantics=("parallel",) * n_axes,
        vmem_limit_bytes=VMEM_LIMIT,
    )


def _bn_fold(stats, count, gamma, beta):
    """Fold one-pass batch stats (sum, sum_sq) + affine into y = scale*x + shift."""
    c = stats.shape[-2]
    total = stats.reshape(-1, c, 2).sum(axis=0)          # (C, 2)
    mean = total[:, 0] / count
    var = jnp.maximum(total[:, 1] / count - mean * mean, 0.0)
    scale = gamma * jax.lax.rsqrt(var + EPS)
    shift = beta - scale * mean
    return scale.reshape(-1, 1), shift.reshape(-1, 1)    # (C, 1) each


# ---------------------------------------------------------------------------
# Pass A: conv1 (1x1) + bn1 partial stats.
# ---------------------------------------------------------------------------
def _conv1x1_stats_kernel(x_ref, w_ref, y_ref, st_ref):
    x = x_ref[0].astype(jnp.bfloat16)                                   # (Cin, TM)
    acc = jnp.dot(w_ref[...], x, preferred_element_type=jnp.float32)    # (F, TM)
    st_ref[0, 0, :, 0:1] = jnp.sum(acc, axis=1, keepdims=True)
    st_ref[0, 0, :, 1:2] = jnp.sum(acc * acc, axis=1, keepdims=True)
    y_ref[0] = acc.astype(y_ref.dtype)


# ---------------------------------------------------------------------------
# Pass B: bn1-normalize + relu + conv2 (3x3, pad=1, stride) + bn2 partial stats.
# One sample per grid step; im2col built with pltpu.roll + edge masks on the
# flat spatial axis -> single (F, 9F) x (9F, HW) MXU matmul.
# ---------------------------------------------------------------------------
def _bn_relu_conv3x3_stats_kernel(y1_ref, s1_ref, b1_ref, w2_ref, y2_ref, st_ref,
                                  *, H, W, stride):
    F = y1_ref.shape[1]
    HW = H * W
    # bn1 folded into one FMA, then ReLU, all in f32.
    a = jnp.maximum(s1_ref[...] * y1_ref[0].astype(jnp.float32) + b1_ref[...], 0.0)

    pos = jax.lax.broadcasted_iota(jnp.int32, (1, HW), 1)
    col = pos % W
    taps = []
    for kh in range(3):
        for kw in range(3):
            s = (kh - 1) * W + (kw - 1)
            t = a if s == 0 else pltpu.roll(a, shift=(-s) % HW, axis=1)
            conds = []
            if kh == 0:
                conds.append(pos >= W)            # needs row h-1 >= 0
            elif kh == 2:
                conds.append(pos < HW - W)        # needs row h+1 <= H-1
            if kw == 0:
                conds.append(col >= 1)            # needs col w-1 >= 0
            elif kw == 2:
                conds.append(col < W - 1)         # needs col w+1 <= W-1
            if conds:
                valid = functools.reduce(lambda u, v: u & v, conds)
                t = jnp.where(valid, t, 0.0)
            taps.append(t)
    # Channel axis is sublane-aligned (F multiple of 8 typical) -> cheap concat.
    # NOTE: built in f32 for lowering safety; at large C build taps in bf16.
    patches = jnp.concatenate(taps, axis=0)                              # (9F, HW)
    acc = jnp.dot(w2_ref[...], patches.astype(jnp.bfloat16),
                  preferred_element_type=jnp.float32)                    # (F, HW)
    if stride == 2:
        # TODO(synk): stride=2 recomputes the stride-1 conv and subsamples (4x MXU
        # waste); a strided im2col would avoid this. Not exercised by the demo.
        Ho, Wo = H // 2, W // 2
        acc = acc.reshape(F, Ho, 2, Wo, 2)[:, :, 0, :, 0].reshape(F, Ho * Wo)
    st_ref[0, :, 0:1] = jnp.sum(acc, axis=1, keepdims=True)
    st_ref[0, :, 1:2] = jnp.sum(acc * acc, axis=1, keepdims=True)
    y2_ref[0] = acc.astype(y2_ref.dtype)


# ---------------------------------------------------------------------------
# Pass C: bn2-normalize + relu + conv3 (1x1) [+ shortcut 1x1] + partial stats.
# ---------------------------------------------------------------------------
def _bn_relu_conv1x1_x2_stats_kernel(y2_ref, s2_ref, b2_ref, w3_ref, xs_ref, ws_ref,
                                     y3_ref, ysc_ref, st3_ref, sts_ref):
    a = jnp.maximum(s2_ref[...] * y2_ref[0].astype(jnp.float32) + b2_ref[...], 0.0)
    acc3 = jnp.dot(w3_ref[...], a.astype(jnp.bfloat16),
                   preferred_element_type=jnp.float32)                   # (4F, TM)
    st3_ref[0, 0, :, 0:1] = jnp.sum(acc3, axis=1, keepdims=True)
    st3_ref[0, 0, :, 1:2] = jnp.sum(acc3 * acc3, axis=1, keepdims=True)
    y3_ref[0] = acc3.astype(y3_ref.dtype)

    accs = jnp.dot(ws_ref[...], xs_ref[0].astype(jnp.bfloat16),
                   preferred_element_type=jnp.float32)                   # (4F, TM)
    sts_ref[0, 0, :, 0:1] = jnp.sum(accs, axis=1, keepdims=True)
    sts_ref[0, 0, :, 1:2] = jnp.sum(accs * accs, axis=1, keepdims=True)
    ysc_ref[0] = accs.astype(ysc_ref.dtype)


def _bn_relu_conv1x1_stats_kernel(y2_ref, s2_ref, b2_ref, w3_ref, y3_ref, st3_ref):
    a = jnp.maximum(s2_ref[...] * y2_ref[0].astype(jnp.float32) + b2_ref[...], 0.0)
    acc3 = jnp.dot(w3_ref[...], a.astype(jnp.bfloat16),
                   preferred_element_type=jnp.float32)
    st3_ref[0, 0, :, 0:1] = jnp.sum(acc3, axis=1, keepdims=True)
    st3_ref[0, 0, :, 1:2] = jnp.sum(acc3 * acc3, axis=1, keepdims=True)
    y3_ref[0] = acc3.astype(y3_ref.dtype)


# ---------------------------------------------------------------------------
# Pass D: bn3-normalize [+ bnS-normalize] + residual add + relu.
# ---------------------------------------------------------------------------
def _finalize_proj_kernel(y3_ref, ysc_ref, s3_ref, b3_ref, ss_ref, bs_ref, o_ref):
    main = s3_ref[...] * y3_ref[0].astype(jnp.float32) + b3_ref[...]
    sc = ss_ref[...] * ysc_ref[0].astype(jnp.float32) + bs_ref[...]
    o_ref[0] = jnp.maximum(main + sc, 0.0).astype(o_ref.dtype)


def _finalize_identity_kernel(y3_ref, x_ref, s3_ref, b3_ref, o_ref):
    main = s3_ref[...] * y3_ref[0].astype(jnp.float32) + b3_ref[...]
    o_ref[0] = jnp.maximum(main + x_ref[0].astype(jnp.float32), 0.0).astype(o_ref.dtype)


# ---------------------------------------------------------------------------
# Parameters (PyTorch-equivalent layouts). Conv biases are omitted: a bias added
# immediately before training-mode BatchNorm cancels exactly in the output.
# ---------------------------------------------------------------------------
def make_params(key, in_filters, filters, expand):
    F, E = filters, expand
    ks = jax.random.split(key, 12)
    w2 = 0.1 * jax.random.normal(ks[1], (F, F, 3, 3), jnp.float32)   # (Cout, Cin, kh, kw)
    return {
        "w1": 0.1 * jax.random.normal(ks[0], (F, in_filters), jnp.float32),       # (Cout, Cin)
        "w2m": jnp.transpose(w2, (0, 2, 3, 1)).reshape(F, 9 * F),                 # (Cout, kh*kw*Cin)
        "w3": 0.1 * jax.random.normal(ks[2], (F * E, F), jnp.float32),
        "ws": 0.1 * jax.random.normal(ks[3], (F * E, in_filters), jnp.float32),   # shortcut, bias=False
        "g1": 1.0 + 0.1 * jax.random.normal(ks[4], (F,), jnp.float32),
        "be1": 0.1 * jax.random.normal(ks[5], (F,), jnp.float32),
        "g2": 1.0 + 0.1 * jax.random.normal(ks[6], (F,), jnp.float32),
        "be2": 0.1 * jax.random.normal(ks[7], (F,), jnp.float32),
        "g3": 1.0 + 0.1 * jax.random.normal(ks[8], (F * E,), jnp.float32),
        "be3": 0.1 * jax.random.normal(ks[9], (F * E,), jnp.float32),
        "gs": 1.0 + 0.1 * jax.random.normal(ks[10], (F * E,), jnp.float32),
        "bes": 0.1 * jax.random.normal(ks[11], (F * E,), jnp.float32),
    }


# ---------------------------------------------------------------------------
# Forward wrapper.
# ---------------------------------------------------------------------------
def deep_block_forward(inp, params, *, filters, filter_expand=4, stride=1,
                       kernel_size=1):
    # TODO(synk): only kernel_size=1 (i.e. a 3x3 middle conv) is supported - the
    # module default; other sizes would need a different im2col width.
    assert kernel_size == 1
    N, Cin, H, W = inp.shape
    F = filters
    F4 = F * filter_expand
    assert stride in (1, 2) and H % stride == 0 and W % stride == 0
    Ho, Wo = H // stride, W // stride
    HW, HWo = H * W, Ho * Wo
    use_projection = (stride == 2) or (Cin != F4)

    x32 = inp.astype(jnp.float32).reshape(N, Cin, HW)     # flat NCHW (free reshape)
    w1 = params["w1"].astype(jnp.bfloat16)
    w2 = params["w2m"].astype(jnp.bfloat16)
    w3 = params["w3"].astype(jnp.bfloat16)
    act_dtype = jnp.bfloat16                              # inter-pass activation storage

    # ---- Pass A: conv1 + bn1 partial stats ---------------------------------
    tm = _spatial_tile(HW)
    nt = HW // tm
    y1, st1 = pl.pallas_call(
        _conv1x1_stats_kernel,
        grid=(N, nt),
        in_specs=[
            pl.BlockSpec((1, Cin, tm), lambda n, t: (n, 0, t)),
            pl.BlockSpec((F, Cin), lambda n, t: (0, 0)),
        ],
        out_specs=[
            pl.BlockSpec((1, F, tm), lambda n, t: (n, 0, t)),
            pl.BlockSpec((1, 1, F, 2), lambda n, t: (n, t, 0, 0)),
        ],
        out_shape=[
            jax.ShapeDtypeStruct((N, F, HW), act_dtype),
            jax.ShapeDtypeStruct((N, nt, F, 2), jnp.float32),
        ],
        compiler_params=_compiler_params(2),
    )(x32, w1)
    scale1, shift1 = _bn_fold(st1, N * HW, params["g1"], params["be1"])

    # ---- Pass B: bn1+relu -> conv2 (3x3 im2col) + bn2 partial stats --------
    y2, st2 = pl.pallas_call(
        functools.partial(_bn_relu_conv3x3_stats_kernel, H=H, W=W, stride=stride),
        grid=(N,),
        in_specs=[
            pl.BlockSpec((1, F, HW), lambda n: (n, 0, 0)),
            pl.BlockSpec((F, 1), lambda n: (0, 0)),
            pl.BlockSpec((F, 1), lambda n: (0, 0)),
            pl.BlockSpec((F, 9 * F), lambda n: (0, 0)),
        ],
        out_specs=[
            pl.BlockSpec((1, F, HWo), lambda n: (n, 0, 0)),
            pl.BlockSpec((1, F, 2), lambda n: (n, 0, 0)),
        ],
        out_shape=[
            jax.ShapeDtypeStruct((N, F, HWo), act_dtype),
            jax.ShapeDtypeStruct((N, F, 2), jnp.float32),
        ],
        compiler_params=_compiler_params(1),
    )(y1, scale1, shift1, w2)
    scale2, shift2 = _bn_fold(st2, N * HWo, params["g2"], params["be2"])

    # ---- Pass C: bn2+relu -> conv3 (+ shortcut conv) + partial stats -------
    tm2 = _spatial_tile(HWo)
    nt2 = HWo // tm2
    act_spec = pl.BlockSpec((1, F4, tm2), lambda n, t: (n, 0, t))
    act_shape = jax.ShapeDtypeStruct((N, F4, HWo), act_dtype)
    stat_spec = pl.BlockSpec((1, 1, F4, 2), lambda n, t: (n, t, 0, 0))
    stat_shape = jax.ShapeDtypeStruct((N, nt2, F4, 2), jnp.float32)
    vec_spec = pl.BlockSpec((F4, 1), lambda n, t: (0, 0))

    if use_projection:
        ws = params["ws"].astype(jnp.bfloat16)
        if stride == 1:
            xs = x32
        else:
            # TODO(synk): stride-2 shortcut subsample done as cheap XLA glue (Cin ch only).
            xs = inp.astype(jnp.float32)[:, :, ::stride, ::stride].reshape(N, Cin, HWo)
        y3, ysc, st3, sts = pl.pallas_call(
            _bn_relu_conv1x1_x2_stats_kernel,
            grid=(N, nt2),
            in_specs=[
                pl.BlockSpec((1, F, tm2), lambda n, t: (n, 0, t)),
                pl.BlockSpec((F, 1), lambda n, t: (0, 0)),
                pl.BlockSpec((F, 1), lambda n, t: (0, 0)),
                pl.BlockSpec((F4, F), lambda n, t: (0, 0)),
                pl.BlockSpec((1, Cin, tm2), lambda n, t: (n, 0, t)),
                pl.BlockSpec((F4, Cin), lambda n, t: (0, 0)),
            ],
            out_specs=[act_spec, act_spec, stat_spec, stat_spec],
            out_shape=[act_shape, act_shape, stat_shape, stat_shape],
            compiler_params=_compiler_params(2),
        )(y2, scale2, shift2, w3, xs, ws)
        scale3, shift3 = _bn_fold(st3, N * HWo, params["g3"], params["be3"])
        scales, shifts = _bn_fold(sts, N * HWo, params["gs"], params["bes"])

        out = pl.pallas_call(
            _finalize_proj_kernel,
            grid=(N, nt2),
            in_specs=[act_spec, act_spec, vec_spec, vec_spec, vec_spec, vec_spec],
            out_specs=pl.BlockSpec((1, F4, tm2), lambda n, t: (n, 0, t)),
            out_shape=jax.ShapeDtypeStruct((N, F4, HWo), jnp.float32),
            compiler_params=_compiler_params(2),
        )(y3, ysc, scale3, shift3, scales, shifts)
    else:
        y3, st3 = pl.pallas_call(
            _bn_relu_conv1x1_stats_kernel,
            grid=(N, nt2),
            in_specs=[
                pl.BlockSpec((1, F, tm2), lambda n, t: (n, 0, t)),
                pl.BlockSpec((F, 1), lambda n, t: (0, 0)),
                pl.BlockSpec((F, 1), lambda n, t: (0, 0)),
                pl.BlockSpec((F4, F), lambda n, t: (0, 0)),
            ],
            out_specs=[act_spec, stat_spec],
            out_shape=[act_shape, stat_shape],
            compiler_params=_compiler_params(2),
        )(y2, scale2, shift2, w3)
        scale3, shift3 = _bn_fold(st3, N * HWo, params["g3"], params["be3"])

        out = pl.pallas_call(
            _finalize_identity_kernel,
            grid=(N, nt2),
            in_specs=[
                act_spec,
                pl.BlockSpec((1, F4, tm2), lambda n, t: (n, 0, t)),
                vec_spec, vec_spec,
            ],
            out_specs=pl.BlockSpec((1, F4, tm2), lambda n, t: (n, 0, t)),
            out_shape=jax.ShapeDtypeStruct((N, F4, HWo), jnp.float32),
            compiler_params=_compiler_params(2),
        )(y3, x32, scale3, shift3)

    return out.reshape(N, F4, Ho, Wo)    # flat NCHW -> NCHW (free reshape)


if __name__ == "__main__":
    # deepBlock(in_filters=4, filters=8, kernel_size=1, stride=1, filter_expand=4, first=True)
    N, Cin, H, W = 2, 4, 16, 16
    filters, expand, stride = 8, 4, 1

    x = jax.random.normal(jax.random.PRNGKey(0), (N, Cin, H, W), jnp.float32)
    params = make_params(jax.random.PRNGKey(1), Cin, filters, expand)

    fwd = jax.jit(functools.partial(deep_block_forward, filters=filters,
                                    filter_expand=expand, stride=stride))
    out = jax.block_until_ready(fwd(x, params))
    assert out.shape == (N, filters * expand, H // stride, W // stride), out.shape
    assert bool(jnp.all(out >= 0.0)) and bool(jnp.all(jnp.isfinite(out)))
    print("KERNEL_OK")
</pallas_src>

<mosaic_0001>
module attributes {stable_mosaic.version = 11 : i64} {
  func.func @_conv1x1_stats_kernel(%arg0: i32, %arg1: i32, %arg2: memref<1x4x256xf32, #tpu.memory_space<vmem>>, %arg3: memref<8x4xbf16, #tpu.memory_space<vmem>>, %arg4: memref<1x8x256xbf16, #tpu.memory_space<vmem>>, %arg5: memref<1x1x8x2xf32, #tpu.memory_space<vmem>>) attributes {dimension_semantics = [#tpu.dimension_semantics<parallel>, #tpu.dimension_semantics<parallel>], iteration_bounds = array<i64: 2, 1>, scalar_prefetch = 0 : i64, scratch_operands = 0 : i64, tpu.core_type = #tpu.core_type<tc>, window_params = [{transform_indices = @transform_0, window_bounds = array<i64: 1, 4, 256>}, {pipeline_mode = #tpu.pipeline_mode<synchronous>, transform_indices = @transform_1, window_bounds = array<i64: 8, 4>}, {transform_indices = @transform_2, window_bounds = array<i64: 1, 8, 256>}, {transform_indices = @transform_3, window_bounds = array<i64: 1, 1, 8, 2>}]} {
    %c0 = arith.constant 0 : index
    %c0_0 = arith.constant 0 : index
    %c0_1 = arith.constant 0 : index
    %0 = vector.load %arg2[%c0, %c0_0, %c0_1] : memref<1x4x256xf32, #tpu.memory_space<vmem>>, vector<1x4x256xf32>
    %1 = vector.shape_cast %0 : vector<1x4x256xf32> to vector<4x256xf32>
    %2 = arith.truncf %1 : vector<4x256xf32> to vector<4x256xbf16>
    %c0_2 = arith.constant 0 : index
    %c0_3 = arith.constant 0 : index
    %3 = vector.load %arg3[%c0_2, %c0_3] : memref<8x4xbf16, #tpu.memory_space<vmem>>, vector<8x4xbf16>
    %cst = arith.constant dense<0.000000e+00> : vector<8x256xf32>
    %4 = tpu.matmul %3, %2, %cst {dimension_numbers = #tpu.dot_dimension_numbers<[1], [0], [0], [1], [0, 0, 1, 1], [], []>} : vector<8x4xbf16>, vector<4x256xbf16>, vector<8x256xf32> -> vector<8x256xf32>
    %cst_4 = arith.constant dense<0.000000e+00> : vector<8xf32>
    %5 = vector.multi_reduction <add>, %4, %cst_4 [1] : vector<8x256xf32> to vector<8xf32>
    %6 = vector.shape_cast %5 : vector<8xf32> to vector<8x1xf32>
    %c0_5 = arith.constant 0 : index
    %c0_6 = arith.constant 0 : index
    %c0_7 = arith.constant 0 : index
    %c0_8 = arith.constant 0 : index
    %7 = vector.load %arg5[%c0_5, %c0_6, %c0_7, %c0_8] : memref<1x1x8x2xf32, #tpu.memory_space<vmem>>, vector<1x1x8x1xf32>
    %8 = vector.shape_cast %7 : vector<1x1x8x1xf32> to vector<8x1xf32>
    %9 = vector.shape_cast %6 : vector<8x1xf32> to vector<1x1x8x1xf32>
    tpu.vector_store %arg5[%c0_5, %c0_6, %c0_7, %c0_8], %9 {strides = array<i32>} : memref<1x1x8x2xf32, #tpu.memory_space<vmem>>, vector<1x1x8x1xf32>,
    %10 = arith.mulf %4, %4 : vector<8x256xf32>
    %cst_9 = arith.constant dense<0.000000e+00> : vector<8xf32>
    %11 = vector.multi_reduction <add>, %10, %cst_9 [1] : vector<8x256xf32> to vector<8xf32>
    %12 = vector.shape_cast %11 : vector<8xf32> to vector<8x1xf32>
    %c0_10 = arith.constant 0 : index
    %c0_11 = arith.constant 0 : index
    %c0_12 = arith.constant 0 : index
    %c1 = arith.constant 1 : index
    %13 = vector.load %arg5[%c0_10, %c0_11, %c0_12, %c1] : memref<1x1x8x2xf32, #tpu.memory_space<vmem>>, vector<1x1x8x1xf32>
    %14 = vector.shape_cast %13 : vector<1x1x8x1xf32> to vector<8x1xf32>
    %15 = vector.shape_cast %12 : vector<8x1xf32> to vector<1x1x8x1xf32>
    tpu.vector_store %arg5[%c0_10, %c0_11, %c0_12, %c1], %15 {strides = array<i32>} : memref<1x1x8x2xf32, #tpu.memory_space<vmem>>, vector<1x1x8x1xf32>,
    %16 = arith.truncf %4 : vector<8x256xf32> to vector<8x256xbf16>
    %c0_13 = arith.constant 0 : index
    %c0_14 = arith.constant 0 : index
    %c0_15 = arith.constant 0 : index
    %17 = vector.load %arg4[%c0_13, %c0_14, %c0_15] : memref<1x8x256xbf16, #tpu.memory_space<vmem>>, vector<1x8x256xbf16>
    %18 = vector.shape_cast %17 : vector<1x8x256xbf16> to vector<8x256xbf16>
    %19 = vector.shape_cast %16 : vector<8x256xbf16> to vector<1x8x256xbf16>
    tpu.vector_store %arg4[%c0_13, %c0_14, %c0_15], %19 {strides = array<i32>} : memref<1x8x256xbf16, #tpu.memory_space<vmem>>, vector<1x8x256xbf16>,
    return
  }
  func.func @transform_0(%arg0: i32, %arg1: i32) -> (i32, i32, i32) {
    %c0_i32 = arith.constant 0 : i32
    %c0_i32_0 = arith.constant 0 : i32
    return %arg0, %c0_i32, %arg1 : i32, i32, i32
  }
  func.func @transform_1(%arg0: i32, %arg1: i32) -> (i32, i32) {
    %c0_i32 = arith.constant 0 : i32
    %c0_i32_0 = arith.constant 0 : i32
    %c0_i32_1 = arith.constant 0 : i32
    return %c0_i32, %c0_i32_0 : i32, i32
  }
  func.func @transform_2(%arg0: i32, %arg1: i32) -> (i32, i32, i32) {
    %c0_i32 = arith.constant 0 : i32
    %c0_i32_0 = arith.constant 0 : i32
    return %arg0, %c0_i32, %arg1 : i32, i32, i32
  }
  func.func @transform_3(%arg0: i32, %arg1: i32) -> (i32, i32, i32, i32) {
    %c0_i32 = arith.constant 0 : i32
    %c0_i32_0 = arith.constant 0 : i32
    %c0_i32_1 = arith.constant 0 : i32
    return %arg0, %arg1, %c0_i32, %c0_i32_0 : i32, i32, i32, i32
  }
}

module attributes {stable_mosaic.version = 11 : i64} {
  func.func @_bn_relu_conv3x3_stats_kernel(%arg0: i32, %arg1: memref<1x8x256xbf16, #tpu.memory_space<vmem>>, %arg2: memref<8x1xf32, #tpu.memory_space<vmem>>, %arg3: memref<8x1xf32, #tpu.memory_space<vmem>>, %arg4: memref<8x72xbf16, #tpu.memory_space<vmem>>, %arg5: memref<1x8x256xbf16, #tpu.memory_space<vmem>>, %arg6: memref<1x8x2xf32, #tpu.memory_space<vmem>>) attributes {dimension_semantics = [#tpu.dimension_semantics<parallel>], iteration_bounds = array<i64: 2>, scalar_prefetch = 0 : i64, scratch_operands = 0 : i64, tpu.core_type = #tpu.core_type<tc>, window_params = [{transform_indices = @transform_0, window_bounds = array<i64: 1, 8, 256>}, {pipeline_mode = #tpu.pipeline_mode<synchronous>, transform_indices = @transform_1, window_bounds = array<i64: 8, 1>}, {pipeline_mode = #tpu.pipeline_mode<synchronous>, transform_indices = @transform_2, window_bounds = array<i64: 8, 1>}, {pipeline_mode = #tpu.pipeline_mode<synchronous>, transform_indices = @transform_3, window_bounds = array<i64: 8, 72>}, {transform_indices = @transform_4, window_bounds = array<i64: 1, 8, 256>}, {transform_indices = @transform_5, window_bounds = array<i64: 1, 8, 2>}]} {
    %c0 = arith.constant 0 : index
    %c0_0 = arith.constant 0 : index
    %0 = vector.load %arg2[%c0, %c0_0] : memref<8x1xf32, #tpu.memory_space<vmem>>, vector<8x1xf32>
    %c0_1 = arith.constant 0 : index
    %c0_2 = arith.constant 0 : index
    %c0_3 = arith.constant 0 : index
    %1 = vector.load %arg1[%c0_1, %c0_2, %c0_3] : memref<1x8x256xbf16, #tpu.memory_space<vmem>>, vector<1x8x256xbf16>
    %2 = vector.shape_cast %1 : vector<1x8x256xbf16> to vector<8x256xbf16>
    %3 = arith.extf %2 : vector<8x256xbf16> to vector<8x256xf32>
    %4 = vector.broadcast %0 : vector<8x1xf32> to vector<8x256xf32>
    %5 = arith.mulf %4, %3 : vector<8x256xf32>
    %c0_4 = arith.constant 0 : index
    %c0_5 = arith.constant 0 : index
    %6 = vector.load %arg3[%c0_4, %c0_5] : memref<8x1xf32, #tpu.memory_space<vmem>>, vector<8x1xf32>
    %7 = vector.broadcast %6 : vector<8x1xf32> to vector<8x256xf32>
    %8 = arith.addf %5, %7 : vector<8x256xf32>
    %cst = arith.constant 0.000000e+00 : f32
    %9 = vector.broadcast %cst : f32 to vector<8x256xf32>
    %10 = arith.maximumf %8, %9 : vector<8x256xf32>
    %11 = tpu.iota {dimensions = array<i32: 1>} : vector<1x256xi32>
    %c16_i32 = arith.constant 16 : i32
    %c0_i32 = arith.constant 0 : i32
    %12 = arith.cmpi eq, %c16_i32, %c0_i32 : i32
    %c1_i32 = arith.constant 1 : i32
    %13 = arith.select %12, %c1_i32, %c16_i32 : i32
    %14 = vector.broadcast %13 : i32 to vector<1x256xi32>
    %15 = arith.remsi %11, %14 : vector<1x256xi32>
    %c0_i32_6 = arith.constant 0 : i32
    %16 = vector.broadcast %c0_i32_6 : i32 to vector<1x256xi32>
    %17 = arith.cmpi ne, %15, %16 : vector<1x256xi32>
    %c0_i32_7 = arith.constant 0 : i32
    %18 = vector.broadcast %c0_i32_7 : i32 to vector<1x256xi32>
    %19 = arith.cmpi slt, %15, %18 : vector<1x256xi32>
    %c0_i32_8 = arith.constant 0 : i32
    %20 = arith.cmpi slt, %13, %c0_i32_8 : i32
    %21 = vector.broadcast %20 : i1 to vector<1x256xi1>
    %22 = vector.broadcast %21 : vector<1x256xi1> to vector<1x256xi1>
    %23 = arith.xori %19, %22 : vector<1x256xi1>
    %24 = arith.andi %23, %17 : vector<1x256xi1>
    %25 = vector.broadcast %13 : i32 to vector<1x256xi32>
    %26 = arith.addi %15, %25 : vector<1x256xi32>
    %27 = arith.select %24, %26, %15 : vector<1x256xi1>, vector<1x256xi32>
    %c17_i32 = arith.constant 17 : i32
    %28 = tpu.dynamic_rotate %10 by %c17_i32 dim 1 : vector<8x256xf32>, i32 -> vector<8x256xf32>
    %c16_i32_9 = arith.constant 16 : i32
    %29 = vector.broadcast %c16_i32_9 : i32 to vector<1x256xi32>
    %30 = arith.cmpi sge, %11, %29 : vector<1x256xi32>
    %c1_i32_10 = arith.constant 1 : i32
    %31 = vector.broadcast %c1_i32_10 : i32 to vector<1x256xi32>
    %32 = arith.cmpi sge, %27, %31 : vector<1x256xi32>
    %33 = arith.andi %30, %32 : vector<1x256xi1>
    %cst_11 = arith.constant 0.000000e+00 : f32
    %34 = vector.shape_cast %33 : vector<1x256xi1> to vector<1x256xi1>
    %35 = vector.broadcast %34 : vector<1x256xi1> to vector<8x256xi1>
    %36 = vector.broadcast %cst_11 : f32 to vector<8x256xf32>
    %37 = arith.select %35, %28, %36 : vector<8x256xi1>, vector<8x256xf32>
    %c16_i32_12 = arith.constant 16 : i32
    %38 = tpu.dynamic_rotate %10 by %c16_i32_12 dim 1 : vector<8x256xf32>, i32 -> vector<8x256xf32>
    %c16_i32_13 = arith.constant 16 : i32
    %39 = vector.broadcast %c16_i32_13 : i32 to vector<1x256xi32>
    %40 = arith.cmpi sge, %11, %39 : vector<1x256xi32>
    %cst_14 = arith.constant 0.000000e+00 : f32
    %41 = vector.shape_cast %40 : vector<1x256xi1> to vector<1x256xi1>
    %42 = vector.broadcast %41 : vector<1x256xi1> to vector<8x256xi1>
    %43 = vector.broadcast %cst_14 : f32 to vector<8x256xf32>
    %44 = arith.select %42, %38, %43 : vector<8x256xi1>, vector<8x256xf32>
    %c15_i32 = arith.constant 15 : i32
    %45 = tpu.dynamic_rotate %10 by %c15_i32 dim 1 : vector<8x256xf32>, i32 -> vector<8x256xf32>
    %c16_i32_15 = arith.constant 16 : i32
    %46 = vector.broadcast %c16_i32_15 : i32 to vector<1x256xi32>
    %47 = arith.cmpi sge, %11, %46 : vector<1x256xi32>
    %c15_i32_16 = arith.constant 15 : i32
    %48 = vector.broadcast %c15_i32_16 : i32 to vector<1x256xi32>
    %49 = arith.cmpi slt, %27, %48 : vector<1x256xi32>
    %50 = arith.andi %47, %49 : vector<1x256xi1>
    %cst_17 = arith.constant 0.000000e+00 : f32
    %51 = vector.shape_cast %50 : vector<1x256xi1> to vector<1x256xi1>
    %52 = vector.broadcast %51 : vector<1x256xi1> to vector<8x256xi1>
    %53 = vector.broadcast %cst_17 : f32 to vector<8x256xf32>
    %54 = arith.select %52, %45, %53 : vector<8x256xi1>, vector<8x256xf32>
    %c1_i32_18 = arith.constant 1 : i32
    %55 = tpu.dynamic_rotate %10 by %c1_i32_18 dim 1 : vector<8x256xf32>, i32 -> vector<8x256xf32>
    %c1_i32_19 = arith.constant 1 : i32
    %56 = vector.broadcast %c1_i32_19 : i32 to vector<1x256xi32>
    %57 = arith.cmpi sge, %27, %56 : vector<1x256xi32>
    %cst_20 = arith.constant 0.000000e+00 : f32
    %58 = vector.shape_cast %57 : vector<1x256xi1> to vector<1x256xi1>
    %59 = vector.broadcast %58 : vector<1x256xi1> to vector<8x256xi1>
    %60 = vector.broadcast %cst_20 : f32 to vector<8x256xf32>
    %61 = arith.select %59, %55, %60 : vector<8x256xi1>, vector<8x256xf32>
    %c255_i32 = arith.constant 255 : i32
    %62 = tpu.dynamic_rotate %10 by %c255_i32 dim 1 : vector<8x256xf32>, i32 -> vector<8x256xf32>
    %c15_i32_21 = arith.constant 15 : i32
    %63 = vector.broadcast %c15_i32_21 : i32 to vector<1x256xi32>
    %64 = arith.cmpi slt, %27, %63 : vector<1x256xi32>
    %cst_22 = arith.constant 0.000000e+00 : f32
    %65 = vector.shape_cast %64 : vector<1x256xi1> to vector<1x256xi1>
    %66 = vector.broadcast %65 : vector<1x256xi1> to vector<8x256xi1>
    %67 = vector.broadcast %cst_22 : f32 to vector<8x256xf32>
    %68 = arith.select %66, %62, %67 : vector<8x256xi1>, vector<8x256xf32>
    %c241_i32 = arith.constant 241 : i32
    %69 = tpu.dynamic_rotate %10 by %c241_i32 dim 1 : vector<8x256xf32>, i32 -> vector<8x256xf32>
    %c240_i32 = arith.constant 240 : i32
    %70 = vector.broadcast %c240_i32 : i32 to vector<1x256xi32>
    %71 = arith.cmpi slt, %11, %70 : vector<1x256xi32>
    %c1_i32_23 = arith.constant 1 : i32
    %72 = vector.broadcast %c1_i32_23 : i32 to vector<1x256xi32>
    %73 = arith.cmpi sge, %27, %72 : vector<1x256xi32>
    %74 = arith.andi %71, %73 : vector<1x256xi1>
    %cst_24 = arith.constant 0.000000e+00 : f32
    %75 = vector.shape_cast %74 : vector<1x256xi1> to vector<1x256xi1>
    %76 = vector.broadcast %75 : vector<1x256xi1> to vector<8x256xi1>
    %77 = vector.broadcast %cst_24 : f32 to vector<8x256xf32>
    %78 = arith.select %76, %69, %77 : vector<8x256xi1>, vector<8x256xf32>
    %c240_i32_25 = arith.constant 240 : i32
    %79 = tpu.dynamic_rotate %10 by %c240_i32_25 dim 1 : vector<8x256xf32>, i32 -> vector<8x256xf32>
    %c240_i32_26 = arith.constant 240 : i32
    %80 = vector.broadcast %c240_i32_26 : i32 to vector<1x256xi32>
    %81 = arith.cmpi slt, %11, %80 : vector<1x256xi32>
    %cst_27 = arith.constant 0.000000e+00 : f32
    %82 = vector.shape_cast %81 : vector<1x256xi1> to vector<1x256xi1>
    %83 = vector.broadcast %82 : vector<1x256xi1> to vector<8x256xi1>
    %84 = vector.broadcast %cst_27 : f32 to vector<8x256xf32>
    %85 = arith.select %83, %79, %84 : vector<8x256xi1>, vector<8x256xf32>
    %c239_i32 = arith.constant 239 : i32
    %86 = tpu.dynamic_rotate %10 by %c239_i32 dim 1 : vector<8x256xf32>, i32 -> vector<8x256xf32>
    %c240_i32_28 = arith.constant 240 : i32
    %87 = vector.broadcast %c240_i32_28 : i32 to vector<1x256xi32>
    %88 = arith.cmpi slt, %11, %87 : vector<1x256xi32>
    %c15_i32_29 = arith.constant 15 : i32
    %89 = vector.broadcast %c15_i32_29 : i32 to vector<1x256xi32>
    %90 = arith.cmpi slt, %27, %89 : vector<1x256xi32>
    %91 = arith.andi %88, %90 : vector<1x256xi1>
    %cst_30 = arith.constant 0.000000e+00 : f32
    %92 = vector.shape_cast %91 : vector<1x256xi1> to vector<1x256xi1>
    %93 = vector.broadcast %92 : vector<1x256xi1> to vector<8x256xi1>
    %94 = vector.broadcast %cst_30 : f32 to vector<8x256xf32>
    %95 = arith.select %93, %86, %94 : vector<8x256xi1>, vector<8x256xf32>
    %96 = tpu.concatenate %37, %44, %54, %61, %10, %68, %78, %85, %95 in 0 : vector<8x256xf32>, vector<8x256xf32>, vector<8x256xf32>, vector<8x256xf32>, vector<8x256xf32>, vector<8x256xf32>, vector<8x256xf32>, vector<8x256xf32>, vector<8x256xf32> -> vector<72x256xf32>
    %c0_31 = arith.constant 0 : index
    %c0_32 = arith.constant 0 : index
    %97 = vector.load %arg4[%c0_31, %c0_32] : memref<8x72xbf16, #tpu.memory_space<vmem>>, vector<8x72xbf16>
    %98 = arith.truncf %96 : vector<72x256xf32> to vector<72x256xbf16>
    %cst_33 = arith.constant dense<0.000000e+00> : vector<8x256xf32>
    %99 = tpu.matmul %97, %98, %cst_33 {dimension_numbers = #tpu.dot_dimension_numbers<[1], [0], [0], [1], [0, 0, 1, 1], [], []>} : vector<8x72xbf16>, vector<72x256xbf16>, vector<8x256xf32> -> vector<8x256xf32>
    %cst_34 = arith.constant dense<0.000000e+00> : vector<8xf32>
    %100 = vector.multi_reduction <add>, %99, %cst_34 [1] : vector<8x256xf32> to vector<8xf32>
    %101 = vector.shape_cast %100 : vector<8xf32> to vector<8x1xf32>
    %c0_35 = arith.constant 0 : index
    %c0_36 = arith.constant 0 : index
    %c0_37 = arith.constant 0 : index
    %102 = vector.load %arg6[%c0_35, %c0_36, %c0_37] : memref<1x8x2xf32, #tpu.memory_space<vmem>>, vector<1x8x1xf32>
    %103 = vector.shape_cast %102 : vector<1x8x1xf32> to vector<8x1xf32>
    %104 = vector.shape_cast %101 : vector<8x1xf32> to vector<1x8x1xf32>
    tpu.vector_store %arg6[%c0_35, %c0_36, %c0_37], %104 {strides = array<i32>} : memref<1x8x2xf32, #tpu.memory_space<vmem>>, vector<1x8x1xf32>,
    %105 = arith.mulf %99, %99 : vector<8x256xf32>
    %cst_38 = arith.constant dense<0.000000e+00> : vector<8xf32>
    %106 = vector.multi_reduction <add>, %105, %cst_38 [1] : vector<8x256xf32> to vector<8xf32>
    %107 = vector.shape_cast %106 : vector<8xf32> to vector<8x1xf32>
    %c0_39 = arith.constant 0 : index
    %c0_40 = arith.constant 0 : index
    %c1 = arith.constant 1 : index
    %108 = vector.load %arg6[%c0_39, %c0_40, %c1] : memref<1x8x2xf32, #tpu.memory_space<vmem>>, vector<1x8x1xf32>
    %109 = vector.shape_cast %108 : vector<1x8x1xf32> to vector<8x1xf32>
    %110 = vector.shape_cast %107 : vector<8x1xf32> to vector<1x8x1xf32>
    tpu.vector_store %arg6[%c0_39, %c0_40, %c1], %110 {strides = array<i32>} : memref<1x8x2xf32, #tpu.memory_space<vmem>>, vector<1x8x1xf32>,
    %111 = arith.truncf %99 : vector<8x256xf32> to vector<8x256xbf16>
    %c0_41 = arith.constant 0 : index
    %c0_42 = arith.constant 0 : index
    %c0_43 = arith.constant 0 : index
    %112 = vector.load %arg5[%c0_41, %c0_42, %c0_43] : memref<1x8x256xbf16, #tpu.memory_space<vmem>>, vector<1x8x256xbf16>
    %113 = vector.shape_cast %112 : vector<1x8x256xbf16> to vector<8x256xbf16>
    %114 = vector.shape_cast %111 : vector<8x256xbf16> to vector<1x8x256xbf16>
    tpu.vector_store %arg5[%c0_41, %c0_42, %c0_43], %114 {strides = array<i32>} : memref<1x8x256xbf16, #tpu.memory_space<vmem>>, vector<1x8x256xbf16>,
    return
  }
  func.func @transform_0(%arg0: i32) -> (i32, i32, i32) {
    %c0_i32 = arith.constant 0 : i32
    %c0_i32_0 = arith.constant 0 : i32
    %c0_i32_1 = arith.constant 0 : i32
    return %arg0, %c0_i32, %c0_i32_0 : i32, i32, i32
  }
  func.func @transform_1(%arg0: i32) -> (i32, i32) {
    %c0_i32 = arith.constant 0 : i32
    %c0_i32_0 = arith.constant 0 : i32
    %c0_i32_1 = arith.constant 0 : i32
    return %c0_i32, %c0_i32_0 : i32, i32
  }
  func.func @transform_2(%arg0: i32) -> (i32, i32) {
    %c0_i32 = arith.constant 0 : i32
    %c0_i32_0 = arith.constant 0 : i32
    %c0_i32_1 = arith.constant 0 : i32
    return %c0_i32, %c0_i32_0 : i32, i32
  }
  func.func @transform_3(%arg0: i32) -> (i32, i32) {
    %c0_i32 = arith.constant 0 : i32
    %c0_i32_0 = arith.constant 0 : i32
    %c0_i32_1 = arith.constant 0 : i32
    return %c0_i32, %c0_i32_0 : i32, i32
  }
  func.func @transform_4(%arg0: i32) -> (i32, i32, i32) {
    %c0_i32 = arith.constant 0 : i32
    %c0_i32_0 = arith.constant 0 : i32
    %c0_i32_1 = arith.constant 0 : i32
    return %arg0, %c0_i32, %c0_i32_0 : i32, i32, i32
  }
  func.func @transform_5(%arg0: i32) -> (i32, i32, i32) {
    %c0_i32 = arith.constant 0 : i32
    %c0_i32_0 = arith.constant 0 : i32
    %c0_i32_1 = arith.constant 0 : i32
    return %arg0, %c0_i32, %c0_i32_0 : i32, i32, i32
  }
}

module attributes {stable_mosaic.version = 11 : i64} {
  func.func @_bn_relu_conv1x1_x2_stats_kernel(%arg0: i32, %arg1: i32, %arg2: memref<1x8x256xbf16, #tpu.memory_space<vmem>>, %arg3: memref<8x1xf32, #tpu.memory_space<vmem>>, %arg4: memref<8x1xf32, #tpu.memory_space<vmem>>, %arg5: memref<32x8xbf16, #tpu.memory_space<vmem>>, %arg6: memref<1x4x256xf32, #tpu.memory_space<vmem>>, %arg7: memref<32x4xbf16, #tpu.memory_space<vmem>>, %arg8: memref<1x32x256xbf16, #tpu.memory_space<vmem>>, %arg9: memref<1x32x256xbf16, #tpu.memory_space<vmem>>, %arg10: memref<1x1x32x2xf32, #tpu.memory_space<vmem>>, %arg11: memref<1x1x32x2xf32, #tpu.memory_space<vmem>>) attributes {dimension_semantics = [#tpu.dimension_semantics<parallel>, #tpu.dimension_semantics<parallel>], iteration_bounds = array<i64: 2, 1>, scalar_prefetch = 0 : i64, scratch_operands = 0 : i64, tpu.core_type = #tpu.core_type<tc>, window_params = [{transform_indices = @transform_0, window_bounds = array<i64: 1, 8, 256>}, {pipeline_mode = #tpu.pipeline_mode<synchronous>, transform_indices = @transform_1, window_bounds = array<i64: 8, 1>}, {pipeline_mode = #tpu.pipeline_mode<synchronous>, transform_indices = @transform_2, window_bounds = array<i64: 8, 1>}, {pipeline_mode = #tpu.pipeline_mode<synchronous>, transform_indices = @transform_3, window_bounds = array<i64: 32, 8>}, {transform_indices = @transform_4, window_bounds = array<i64: 1, 4, 256>}, {pipeline_mode = #tpu.pipeline_mode<synchronous>, transform_indices = @transform_5, window_bounds = array<i64: 32, 4>}, {transform_indices = @transform_6, window_bounds = array<i64: 1, 32, 256>}, {transform_indices = @transform_7, window_bounds = array<i64: 1, 32, 256>}, {transform_indices = @transform_8, window_bounds = array<i64: 1, 1, 32, 2>}, {transform_indices = @transform_9, window_bounds = array<i64: 1, 1, 32, 2>}]} {
    %c0 = arith.constant 0 : index
    %c0_0 = arith.constant 0 : index
    %0 = vector.load %arg3[%c0, %c0_0] : memref<8x1xf32, #tpu.memory_space<vmem>>, vector<8x1xf32>
    %c0_1 = arith.constant 0 : index
    %c0_2 = arith.constant 0 : index
    %c0_3 = arith.constant 0 : index
    %1 = vector.load %arg2[%c0_1, %c0_2, %c0_3] : memref<1x8x256xbf16, #tpu.memory_space<vmem>>, vector<1x8x256xbf16>
    %2 = vector.shape_cast %1 : vector<1x8x256xbf16> to vector<8x256xbf16>
    %3 = arith.extf %2 : vector<8x256xbf16> to vector<8x256xf32>
    %4 = vector.broadcast %0 : vector<8x1xf32> to vector<8x256xf32>
    %5 = arith.mulf %4, %3 : vector<8x256xf32>
    %c0_4 = arith.constant 0 : index
    %c0_5 = arith.constant 0 : index
    %6 = vector.load %arg4[%c0_4, %c0_5] : memref<8x1xf32, #tpu.memory_space<vmem>>, vector<8x1xf32>
    %7 = vector.broadcast %6 : vector<8x1xf32> to vector<8x256xf32>
    %8 = arith.addf %5, %7 : vector<8x256xf32>
    %cst = arith.constant 0.000000e+00 : f32
    %9 = vector.broadcast %cst : f32 to vector<8x256xf32>
    %10 = arith.maximumf %8, %9 : vector<8x256xf32>
    %c0_6 = arith.constant 0 : index
    %c0_7 = arith.constant 0 : index
    %11 = vector.load %arg5[%c0_6, %c0_7] : memref<32x8xbf16, #tpu.memory_space<vmem>>, vector<32x8xbf16>
    %12 = arith.truncf %10 : vector<8x256xf32> to vector<8x256xbf16>
    %cst_8 = arith.constant dense<0.000000e+00> : vector<32x256xf32>
    %13 = tpu.matmul %11, %12, %cst_8 {dimension_numbers = #tpu.dot_dimension_numbers<[1], [0], [0], [1], [0, 0, 1, 1], [], []>} : vector<32x8xbf16>, vector<8x256xbf16>, vector<32x256xf32> -> vector<32x256xf32>
    %cst_9 = arith.constant dense<0.000000e+00> : vector<32xf32>
    %14 = vector.multi_reduction <add>, %13, %cst_9 [1] : vector<32x256xf32> to vector<32xf32>
    %15 = vector.shape_cast %14 : vector<32xf32> to vector<32x1xf32>
    %c0_10 = arith.constant 0 : index
    %c0_11 = arith.constant 0 : index
    %c0_12 = arith.constant 0 : index
    %c0_13 = arith.constant 0 : index
    %16 = vector.load %arg10[%c0_10, %c0_11, %c0_12, %c0_13] : memref<1x1x32x2xf32, #tpu.memory_space<vmem>>, vector<1x1x32x1xf32>
    %17 = vector.shape_cast %16 : vector<1x1x32x1xf32> to vector<32x1xf32>
    %18 = vector.shape_cast %15 : vector<32x1xf32> to vector<1x1x32x1xf32>
    tpu.vector_store %arg10[%c0_10, %c0_11, %c0_12, %c0_13], %18 {strides = array<i32>} : memref<1x1x32x2xf32, #tpu.memory_space<vmem>>, vector<1x1x32x1xf32>,
    %19 = arith.mulf %13, %13 : vector<32x256xf32>
    %cst_14 = arith.constant dense<0.000000e+00> : vector<32xf32>
    %20 = vector.multi_reduction <add>, %19, %cst_14 [1] : vector<32x256xf32> to vector<32xf32>
    %21 = vector.shape_cast %20 : vector<32xf32> to vector<32x1xf32>
    %c0_15 = arith.constant 0 : index
    %c0_16 = arith.constant 0 : index
    %c0_17 = arith.constant 0 : index
    %c1 = arith.constant 1 : index
    %22 = vector.load %arg10[%c0_15, %c0_16, %c0_17, %c1] : memref<1x1x32x2xf32, #tpu.memory_space<vmem>>, vector<1x1x32x1xf32>
    %23 = vector.shape_cast %22 : vector<1x1x32x1xf32> to vector<32x1xf32>
    %24 = vector.shape_cast %21 : vector<32x1xf32> to vector<1x1x32x1xf32>
    tpu.vector_store %arg10[%c0_15, %c0_16, %c0_17, %c1], %24 {strides = array<i32>} : memref<1x1x32x2xf32, #tpu.memory_space<vmem>>, vector<1x1x32x1xf32>,
    %25 = arith.truncf %13 : vector<32x256xf32> to vector<32x256xbf16>
    %c0_18 = arith.constant 0 : index
    %c0_19 = arith.constant 0 : index
    %c0_20 = arith.constant 0 : index
    %26 = vector.load %arg8[%c0_18, %c0_19, %c0_20] : memref<1x32x256xbf16, #tpu.memory_space<vmem>>, vector<1x32x256xbf16>
    %27 = vector.shape_cast %26 : vector<1x32x256xbf16> to vector<32x256xbf16>
    %28 = vector.shape_cast %25 : vector<32x256xbf16> to vector<1x32x256xbf16>
    tpu.vector_store %arg8[%c0_18, %c0_19, %c0_20], %28 {strides = array<i32>} : memref<1x32x256xbf16, #tpu.memory_space<vmem>>, vector<1x32x256xbf16>,
    %c0_21 = arith.constant 0 : index
    %c0_22 = arith.constant 0 : index
    %29 = vector.load %arg7[%c0_21, %c0_22] : memref<32x4xbf16, #tpu.memory_space<vmem>>, vector<32x4xbf16>
    %c0_23 = arith.constant 0 : index
    %c0_24 = arith.constant 0 : index
    %c0_25 = arith.constant 0 : index
    %30 = vector.load %arg6[%c0_23, %c0_24, %c0_25] : memref<1x4x256xf32, #tpu.memory_space<vmem>>, vector<1x4x256xf32>
    %31 = vector.shape_cast %30 : vector<1x4x256xf32> to vector<4x256xf32>
    %32 = arith.truncf %31 : vector<4x256xf32> to vector<4x256xbf16>
    %cst_26 = arith.constant dense<0.000000e+00> : vector<32x256xf32>
    %33 = tpu.matmul %29, %32, %cst_26 {dimension_numbers = #tpu.dot_dimension_numbers<[1], [0], [0], [1], [0, 0, 1, 1], [], []>} : vector<32x4xbf16>, vector<4x256xbf16>, vector<32x256xf32> -> vector<32x256xf32>
    %cst_27 = arith.constant dense<0.000000e+00> : vector<32xf32>
    %34 = vector.multi_reduction <add>, %33, %cst_27 [1] : vector<32x256xf32> to vector<32xf32>
    %35 = vector.shape_cast %34 : vector<32xf32> to vector<32x1xf32>
    %c0_28 = arith.constant 0 : index
    %c0_29 = arith.constant 0 : index
    %c0_30 = arith.constant 0 : index
    %c0_31 = arith.constant 0 : index
    %36 = vector.load %arg11[%c0_28, %c0_29, %c0_30, %c0_31] : memref<1x1x32x2xf32, #tpu.memory_space<vmem>>, vector<1x1x32x1xf32>
    %37 = vector.shape_cast %36 : vector<1x1x32x1xf32> to vector<32x1xf32>
    %38 = vector.shape_cast %35 : vector<32x1xf32> to vector<1x1x32x1xf32>
    tpu.vector_store %arg11[%c0_28, %c0_29, %c0_30, %c0_31], %38 {strides = array<i32>} : memref<1x1x32x2xf32, #tpu.memory_space<vmem>>, vector<1x1x32x1xf32>,
    %39 = arith.mulf %33, %33 : vector<32x256xf32>
    %cst_32 = arith.constant dense<0.000000e+00> : vector<32xf32>
    %40 = vector.multi_reduction <add>, %39, %cst_32 [1] : vector<32x256xf32> to vector<32xf32>
    %41 = vector.shape_cast %40 : vector<32xf32> to vector<32x1xf32>
    %c0_33 = arith.constant 0 : index
    %c0_34 = arith.constant 0 : index
    %c0_35 = arith.constant 0 : index
    %c1_36 = arith.constant 1 : index
    %42 = vector.load %arg11[%c0_33, %c0_34, %c0_35, %c1_36] : memref<1x1x32x2xf32, #tpu.memory_space<vmem>>, vector<1x1x32x1xf32>
    %43 = vector.shape_cast %42 : vector<1x1x32x1xf32> to vector<32x1xf32>
    %44 = vector.shape_cast %41 : vector<32x1xf32> to vector<1x1x32x1xf32>
    tpu.vector_store %arg11[%c0_33, %c0_34, %c0_35, %c1_36], %44 {strides = array<i32>} : memref<1x1x32x2xf32, #tpu.memory_space<vmem>>, vector<1x1x32x1xf32>,
    %45 = arith.truncf %33 : vector<32x256xf32> to vector<32x256xbf16>
    %c0_37 = arith.constant 0 : index
    %c0_38 = arith.constant 0 : index
    %c0_39 = arith.constant 0 : index
    %46 = vector.load %arg9[%c0_37, %c0_38, %c0_39] : memref<1x32x256xbf16, #tpu.memory_space<vmem>>, vector<1x32x256xbf16>
    %47 = vector.shape_cast %46 : vector<1x32x256xbf16> to vector<32x256xbf16>
    %48 = vector.shape_cast %45 : vector<32x256xbf16> to vector<1x32x256xbf16>
    tpu.vector_store %arg9[%c0_37, %c0_38, %c0_39], %48 {strides = array<i32>} : memref<1x32x256xbf16, #tpu.memory_space<vmem>>, vector<1x32x256xbf16>,
    return
  }
  func.func @transform_0(%arg0: i32, %arg1: i32) -> (i32, i32, i32) {
    %c0_i32 = arith.constant 0 : i32
    %c0_i32_0 = arith.constant 0 : i32
    return %arg0, %c0_i32, %arg1 : i32, i32, i32
  }
  func.func @transform_1(%arg0: i32, %arg1: i32) -> (i32, i32) {
    %c0_i32 = arith.constant 0 : i32
    %c0_i32_0 = arith.constant 0 : i32
    %c0_i32_1 = arith.constant 0 : i32
    return %c0_i32, %c0_i32_0 : i32, i32
  }
  func.func @transform_2(%arg0: i32, %arg1: i32) -> (i32, i32) {
    %c0_i32 = arith.constant 0 : i32
    %c0_i32_0 = arith.constant 0 : i32
    %c0_i32_1 = arith.constant 0 : i32
    return %c0_i32, %c0_i32_0 : i32, i32
  }
  func.func @transform_3(%arg0: i32, %arg1: i32) -> (i32, i32) {
    %c0_i32 = arith.constant 0 : i32
    %c0_i32_0 = arith.constant 0 : i32
    %c0_i32_1 = arith.constant 0 : i32
    return %c0_i32, %c0_i32_0 : i32, i32
  }
  func.func @transform_4(%arg0: i32, %arg1: i32) -> (i32, i32, i32) {
    %c0_i32 = arith.constant 0 : i32
    %c0_i32_0 = arith.constant 0 : i32
    return %arg0, %c0_i32, %arg1 : i32, i32, i32
  }
  func.func @transform_5(%arg0: i32, %arg1: i32) -> (i32, i32) {
    %c0_i32 = arith.constant 0 : i32
    %c0_i32_0 = arith.constant 0 : i32
    %c0_i32_1 = arith.constant 0 : i32
    return %c0_i32, %c0_i32_0 : i32, i32
  }
  func.func @transform_6(%arg0: i32, %arg1: i32) -> (i32, i32, i32) {
    %c0_i32 = arith.constant 0 : i32
    %c0_i32_0 = arith.constant 0 : i32
    return %arg0, %c0_i32, %arg1 : i32, i32, i32
  }
  func.func @transform_7(%arg0: i32, %arg1: i32) -> (i32, i32, i32) {
    %c0_i32 = arith.constant 0 : i32
    %c0_i32_0 = arith.constant 0 : i32
    return %arg0, %c0_i32, %arg1 : i32, i32, i32
  }
  func.func @transform_8(%arg0: i32, %arg1: i32) -> (i32, i32, i32, i32) {
    %c0_i32 = arith.constant 0 : i32
    %c0_i32_0 = arith.constant 0 : i32
    %c0_i32_1 = arith.constant 0 : i32
    return %arg0, %arg1, %c0_i32, %c0_i32_0 : i32, i32, i32, i32
  }
  func.func @transform_9(%arg0: i32, %arg1: i32) -> (i32, i32, i32, i32) {
    %c0_i32 = arith.constant 0 : i32
    %c0_i32_0 = arith.constant 0 : i32
    %c0_i32_1 = arith.constant 0 : i32
    return %arg0, %arg1, %c0_i32, %c0_i32_0 : i32, i32, i32, i32
  }
}

module attributes {stable_mosaic.version = 11 : i64} {
  func.func @_finalize_proj_kernel(%arg0: i32, %arg1: i32, %arg2: memref<1x32x256xbf16, #tpu.memory_space<vmem>>, %arg3: memref<1x32x256xbf16, #tpu.memory_space<vmem>>, %arg4: memref<32x1xf32, #tpu.memory_space<vmem>>, %arg5: memref<32x1xf32, #tpu.memory_space<vmem>>, %arg6: memref<32x1xf32, #tpu.memory_space<vmem>>, %arg7: memref<32x1xf32, #tpu.memory_space<vmem>>, %arg8: memref<1x32x256xf32, #tpu.memory_space<vmem>>) attributes {dimension_semantics = [#tpu.dimension_semantics<parallel>, #tpu.dimension_semantics<parallel>], iteration_bounds = array<i64: 2, 1>, scalar_prefetch = 0 : i64, scratch_operands = 0 : i64, tpu.core_type = #tpu.core_type<tc>, window_params = [{transform_indices = @transform_0, window_bounds = array<i64: 1, 32, 256>}, {transform_indices = @transform_1, window_bounds = array<i64: 1, 32, 256>}, {pipeline_mode = #tpu.pipeline_mode<synchronous>, transform_indices = @transform_2, window_bounds = array<i64: 32, 1>}, {pipeline_mode = #tpu.pipeline_mode<synchronous>, transform_indices = @transform_3, window_bounds = array<i64: 32, 1>}, {pipeline_mode = #tpu.pipeline_mode<synchronous>, transform_indices = @transform_4, window_bounds = array<i64: 32, 1>}, {pipeline_mode = #tpu.pipeline_mode<synchronous>, transform_indices = @transform_5, window_bounds = array<i64: 32, 1>}, {transform_indices = @transform_6, window_bounds = array<i64: 1, 32, 256>}]} {
    %c0 = arith.constant 0 : index
    %c0_0 = arith.constant 0 : index
    %0 = vector.load %arg4[%c0, %c0_0] : memref<32x1xf32, #tpu.memory_space<vmem>>, vector<32x1xf32>
    %c0_1 = arith.constant 0 : index
    %c0_2 = arith.constant 0 : index
    %c0_3 = arith.constant 0 : index
    %1 = vector.load %arg2[%c0_1, %c0_2, %c0_3] : memref<1x32x256xbf16, #tpu.memory_space<vmem>>, vector<1x32x256xbf16>
    %2 = vector.shape_cast %1 : vector<1x32x256xbf16> to vector<32x256xbf16>
    %3 = arith.extf %2 : vector<32x256xbf16> to vector<32x256xf32>
    %4 = vector.broadcast %0 : vector<32x1xf32> to vector<32x256xf32>
    %5 = arith.mulf %4, %3 : vector<32x256xf32>
    %c0_4 = arith.constant 0 : index
    %c0_5 = arith.constant 0 : index
    %6 = vector.load %arg5[%c0_4, %c0_5] : memref<32x1xf32, #tpu.memory_space<vmem>>, vector<32x1xf32>
    %7 = vector.broadcast %6 : vector<32x1xf32> to vector<32x256xf32>
    %8 = arith.addf %5, %7 : vector<32x256xf32>
    %c0_6 = arith.constant 0 : index
    %c0_7 = arith.constant 0 : index
    %9 = vector.load %arg6[%c0_6, %c0_7] : memref<32x1xf32, #tpu.memory_space<vmem>>, vector<32x1xf32>
    %c0_8 = arith.constant 0 : index
    %c0_9 = arith.constant 0 : index
    %c0_10 = arith.constant 0 : index
    %10 = vector.load %arg3[%c0_8, %c0_9, %c0_10] : memref<1x32x256xbf16, #tpu.memory_space<vmem>>, vector<1x32x256xbf16>
    %11 = vector.shape_cast %10 : vector<1x32x256xbf16> to vector<32x256xbf16>
    %12 = arith.extf %11 : vector<32x256xbf16> to vector<32x256xf32>
    %13 = vector.broadcast %9 : vector<32x1xf32> to vector<32x256xf32>
    %14 = arith.mulf %13, %12 : vector<32x256xf32>
    %c0_11 = arith.constant 0 : index
    %c0_12 = arith.constant 0 : index
    %15 = vector.load %arg7[%c0_11, %c0_12] : memref<32x1xf32, #tpu.memory_space<vmem>>, vector<32x1xf32>
    %16 = vector.broadcast %15 : vector<32x1xf32> to vector<32x256xf32>
    %17 = arith.addf %14, %16 : vector<32x256xf32>
    %18 = arith.addf %8, %17 : vector<32x256xf32>
    %cst = arith.constant 0.000000e+00 : f32
    %19 = vector.broadcast %cst : f32 to vector<32x256xf32>
    %20 = arith.maximumf %18, %19 : vector<32x256xf32>
    %c0_13 = arith.constant 0 : index
    %c0_14 = arith.constant 0 : index
    %c0_15 = arith.constant 0 : index
    %21 = vector.load %arg8[%c0_13, %c0_14, %c0_15] : memref<1x32x256xf32, #tpu.memory_space<vmem>>, vector<1x32x256xf32>
    %22 = vector.shape_cast %21 : vector<1x32x256xf32> to vector<32x256xf32>
    %23 = vector.shape_cast %20 : vector<32x256xf32> to vector<1x32x256xf32>
    tpu.vector_store %arg8[%c0_13, %c0_14, %c0_15], %23 {strides = array<i32>} : memref<1x32x256xf32, #tpu.memory_space<vmem>>, vector<1x32x256xf32>,
    return
  }
  func.func @transform_0(%arg0: i32, %arg1: i32) -> (i32, i32, i32) {
    %c0_i32 = arith.constant 0 : i32
    %c0_i32_0 = arith.constant 0 : i32
    return %arg0, %c0_i32, %arg1 : i32, i32, i32
  }
  func.func @transform_1(%arg0: i32, %arg1: i32) -> (i32, i32, i32) {
    %c0_i32 = arith.constant 0 : i32
    %c0_i32_0 = arith.constant 0 : i32
    return %arg0, %c0_i32, %arg1 : i32, i32, i32
  }
  func.func @transform_2(%arg0: i32, %arg1: i32) -> (i32, i32) {
    %c0_i32 = arith.constant 0 : i32
    %c0_i32_0 = arith.constant 0 : i32
    %c0_i32_1 = arith.constant 0 : i32
    return %c0_i32, %c0_i32_0 : i32, i32
  }
  func.func @transform_3(%arg0: i32, %arg1: i32) -> (i32, i32) {
    %c0_i32 = arith.constant 0 : i32
    %c0_i32_0 = arith.constant 0 : i32
    %c0_i32_1 = arith.constant 0 : i32
    return %c0_i32, %c0_i32_0 : i32, i32
  }
  func.func @transform_4(%arg0: i32, %arg1: i32) -> (i32, i32) {
    %c0_i32 = arith.constant 0 : i32
    %c0_i32_0 = arith.constant 0 : i32
    %c0_i32_1 = arith.constant 0 : i32
    return %c0_i32, %c0_i32_0 : i32, i32
  }
  func.func @transform_5(%arg0: i32, %arg1: i32) -> (i32, i32) {
    %c0_i32 = arith.constant 0 : i32
    %c0_i32_0 = arith.constant 0 : i32
    %c0_i32_1 = arith.constant 0 : i32
    return %c0_i32, %c0_i32_0 : i32, i32
  }
  func.func @transform_6(%arg0: i32, %arg1: i32) -> (i32, i32, i32) {
    %c0_i32 = arith.constant 0 : i32
    %c0_i32_0 = arith.constant 0 : i32
    return %arg0, %c0_i32, %arg1 : i32, i32, i32
  }
}

</mosaic_0001>

<llo_original>
// kernel: deep_block_forward.4
$region0: #{deep_block_forward.4}
  #allocation0 [shape = 'u32[]', space=smem, size = 0x4, offset = 0x4, fixed_abs, tag = 'smem constant byte address 0x4 - core index']
  #allocation1 [shape = 'u32[144,128]{1,0:T(1,128)}', space=vmem, size = 0x12000, scoped, tag = 'internal scratch']
  %s0 = inlined_call_operand.vmem [shape: f32[2,4,256], index: 0, kind: input, shape index: {}]
  %s1 = inlined_call_operand.vmem [shape: bf16[8,4], index: 1, kind: input, shape index: {}]
  %s2 = inlined_call_operand.vmem [shape: bf16[2,8,256], index: 2, kind: output, shape index: {0}]
  %s3 = inlined_call_operand.vmem [shape: f32[2,1,8,2], index: 3, kind: output, shape index: {1}]
  %4 = xla_tuple %s2, %s3
  %s5 = sld [smem:[#allocation0]]
  $region49: #{deep_block_forward.4} parent=0
    _
  %s7 = ssub.s32 1, %s5
  %s8 = scalar_select 0, %s7, %s5
  loop: start=0, step=1, limit=4
  $region2: #{deep_block_forward.4} parent=0 // loop_pre_header
    _
  $region3: #{deep_block_forward.4} parent=0 // loop_header
    %s10 = sphi 0, %s14
    %p11 = scmp.ge.s32.totalorder %s10, 4
    %s17 = sphi 0, %s29
    %s18 = sphi 0, %s25
    %s19 = sphi 0, %s17
    %s20 = sphi 0, %s18
    %s21 = sphi 0, %s19
    %s22 = sphi 0, %s20
    %s34 = sphi 0, %s36
    %s37 = sphi 0, %s34
    %s38 = sphi 0, %s37
    %s54 = sphi 0, %s38
    %s58 = sphi 0, %s58
    %s60 = sphi 0, %s58
    %s61 = sphi 0, %s60
    %s75 = sphi 0, %s61
    %s83 = sphi 0, %s85
    %s86 = sphi 0, %s83
    %s87 = sphi 0, %s86
    %s103 = sphi 0, %s87
    %s111 = sphi 0, %s113
    %s114 = sphi 0, %s111
    %s115 = sphi 0, %s114
    %s131 = sphi 0, %s115
  $region4: #{deep_block_forward.4} parent=0 // loop_header_branch
    %13 = sbr.rel (%p11) target = $region8
  $region5: #{deep_block_forward.4} parent=0 // loop_body
    %s15 = ssub.s32 %s10, 1
    %s16 = ssub.s32 %s10, 2
    %s23 = sadd.s32 1, %s18
    %p24 = scmp.ge.s32.totalorder %s23, 1
    %s25 = scalar_select %p24, 0, %s23
    %s26 = sadd.s32 1, %s17
    %s27 = scalar_select %p24, %s26, %s17
    %p28 = scmp.ge.s32.totalorder %s27, 2
    %s29 = scalar_select %p28, 0, %s27
    %s30 = ssub.s32 %s17, %s29
    %s31 = ssub.s32 %s18, %s25
    %s32 = sor.u32 %s30, %s31
    %p33 = scmp.eq.s32.totalorder %s32, 0
    %s35 = sadd.s32 %s34, 1
    %s36 = scalar_select %p33, %s34, %s35
    %p39 = pneg %p33
    %p40 = scmp.eq.s32.totalorder %s10, 1
    %p41 = por %p39, %p40
    %p42 = scmp.ne.s32.totalorder %s34, %s37
    %p43 = scmp.eq.s32.totalorder %s10, 0
    %p44 = por %p42, %p43
    %p45 = scmp.ne.s32.totalorder %s34, %s37
    %p46 = scmp.eq.s32.totalorder %s15, 1
    %p47 = por %p45, %p46
    %p48 = scmp.ne.s32.totalorder %s37, %s38
    %p49 = scmp.eq.s32.totalorder %s15, 0
    %p50 = por %p48, %p49
    %p51 = scmp.ne.s32.totalorder %s37, %s38
    %p52 = scmp.eq.s32.totalorder %s16, 1
    %p53 = por %p51, %p52
    %p55 = scmp.ne.s32.totalorder %s38, %s54
    %p56 = scmp.eq.s32.totalorder %s16, 0
    %p57 = por %p55, %p56
    %s59 = sadd.s32 %s58, 1
    %p62 = scmp.eq.s32.totalorder %s10, 1
    %p63 = scmp.ne.s32.totalorder %s58, %s60
    %p64 = scmp.eq.s32.totalorder %s10, 0
    %p65 = por %p63, %p64
    %p66 = scmp.ne.s32.totalorder %s58, %s60
    %p67 = scmp.eq.s32.totalorder %s15, 1
    %p68 = por %p66, %p67
    %p69 = scmp.ne.s32.totalorder %s60, %s61
    %p70 = scmp.eq.s32.totalorder %s15, 0
    %p71 = por %p69, %p70
    %p72 = scmp.ne.s32.totalorder %s60, %s61
    %p73 = scmp.eq.s32.totalorder %s16, 1
    %p74 = por %p72, %p73
    %p76 = scmp.ne.s32.totalorder %s61, %s75
    %p77 = scmp.eq.s32.totalorder %s16, 0
    %p78 = por %p76, %p77
    %s79 = ssub.s32 %s17, %s29
    %s80 = ssub.s32 %s18, %s25
    %s81 = sor.u32 %s79, %s80
    %p82 = scmp.eq.s32.totalorder %s81, 0
    %s84 = sadd.s32 %s83, 1
    %s85 = scalar_select %p82, %s83, %s84
    %p88 = pneg %p82
    %p89 = scmp.eq.s32.totalorder %s10, 1
    %p90 = por %p88, %p89
    %p91 = scmp.ne.s32.totalorder %s83, %s86
    %p92 = scmp.eq.s32.totalorder %s10, 0
    %p93 = por %p91, %p92
    %p94 = scmp.ne.s32.totalorder %s83, %s86
    %p95 = scmp.eq.s32.totalorder %s15, 1
    %p96 = por %p94, %p95
    %p97 = scmp.ne.s32.totalorder %s86, %s87
    %p98 = scmp.eq.s32.totalorder %s15, 0
    %p99 = por %p97, %p98
    %p100 = scmp.ne.s32.totalorder %s86, %s87
    %p101 = scmp.eq.s32.totalorder %s16, 1
    %p102 = por %p100, %p101
    %p104 = scmp.ne.s32.totalorder %s87, %s103
    %p105 = scmp.eq.s32.totalorder %s16, 0
    %p106 = por %p104, %p105
    %s107 = ssub.s32 %s17, %s29
    %s108 = ssub.s32 %s18, %s25
    %s109 = sor.u32 %s107, %s108
    %p110 = scmp.eq.s32.totalorder %s109, 0
    %s112 = sadd.s32 %s111, 1
    %s113 = scalar_select %p110, %s111, %s112
    %p116 = pneg %p110
    %p117 = scmp.eq.s32.totalorder %s10, 1
    %p118 = por %p116, %p117
    %p119 = scmp.ne.s32.totalorder %s111, %s114
    %p120 = scmp.eq.s32.totalorder %s10, 0
    %p121 = por %p119, %p120
    %p122 = scmp.ne.s32.totalorder %s111, %s114
    %p123 = scmp.eq.s32.totalorder %s15, 1
    %p124 = por %p122, %p123
    %p125 = scmp.ne.s32.totalorder %s114, %s115
    %p126 = scmp.eq.s32.totalorder %s15, 0
    %p127 = por %p125, %p126
    %p128 = scmp.ne.s32.totalorder %s114, %s115
    %p129 = scmp.eq.s32.totalorder %s16, 1
    %p130 = por %p128, %p129
    %p132 = scmp.ne.s32.totalorder %s115, %s131
    %p133 = scmp.eq.s32.totalorder %s16, 0
    %p134 = por %p132, %p133
    %p135 = scmp.le.s32.totalorder 1, %s10
    %p136 = scmp.lt.s32.totalorder %s10, 3
    %p137 = pnand %p135, %p136
    %p138 = pneg %p137
    // Predicated region
    $region9: #{deep_block_forward.4} parent=5 // pred_check
      _
    $region10: #{deep_block_forward.4} parent=5 // pred_check_branch
      %140 = sbr.rel (%p137) target = $region12
    $region11: #{deep_block_forward.4} parent=5 // pred_region
      %s141 = ssub.s32 %s10, 1
      // Predicated region
      $region13: #{deep_block_forward.4} parent=11 // pred_check
        %p142 = pneg %p71
      $region14: #{deep_block_forward.4} parent=11 // pred_check_branch
        %144 = sbr.rel (%p142) target = $region16
      $region15: #{deep_block_forward.4} parent=11 // pred_region
        _
      $region16: #{deep_block_forward.4} parent=11 // pred_fallthru
        _
    $region12: #{deep_block_forward.4} parent=5 // pred_fallthru
      _
    %p145 = scmp.lt.s32.totalorder %s10, 2
    // Predicated region
    $region17: #{deep_block_forward.4} parent=5 // pred_check
      %p146 = pneg %p145
    $region18: #{deep_block_forward.4} parent=5 // pred_check_branch
      %148 = sbr.rel (%p146) target = $region20
    $region19: #{deep_block_forward.4} parent=5 // pred_region
      // Predicated region
      $region21: #{deep_block_forward.4} parent=19 // pred_check
        %p149 = pneg %p44
      $region22: #{deep_block_forward.4} parent=19 // pred_check_branch
        %151 = sbr.rel (%p149) target = $region24
      $region23: #{deep_block_forward.4} parent=19 // pred_region
        %s152 = smul.u32 2, %s18
        %p153 = scmp.lt.s32.totalorder %s17, 1
        %s154 = scalar_select %p153, %s17, 1
        %p155 = scmp.lt.s32.totalorder %s152, 1
        %s156 = scalar_select %p155, %s152, 1
        %s157 = smul.addr %s154, 2
        %s158 = sadd.s32 %s156, %s157
        %s159 = smul.addr %s158, 4
        %s160 = scalar_lea.vmem %s0, %s159
        %s161 = smul.u32 2, %s18
      $region24: #{deep_block_forward.4} parent=19 // pred_fallthru
        _
    $region20: #{deep_block_forward.4} parent=5 // pred_fallthru
      _
    %p162 = scmp.le.s32.totalorder 1, %s10
    %p163 = scmp.lt.s32.totalorder %s10, 3
    %p164 = pnand %p162, %p163
    %p165 = pneg %p164
    // Predicated region
    $region25: #{deep_block_forward.4} parent=5 // pred_check
      _
    $region26: #{deep_block_forward.4} parent=5 // pred_check_branch
      %167 = sbr.rel (%p164) target = $region28
    $region27: #{deep_block_forward.4} parent=5 // pred_region
      %s168 = ssub.s32 %s10, 1
      %s169 = smul.u32 2, %s20
      %p170 = scmp.lt.s32.totalorder %s19, 1
      %s171 = scalar_select %p170, %s19, 1
      %p172 = scmp.lt.s32.totalorder %s169, 1
      %s173 = scalar_select %p172, %s169, 1
      %s174 = smul.addr %s171, 2
      %s175 = sadd.s32 %s173, %s174
      %s176 = smul.addr %s175, 4
      %s177 = scalar_lea.vmem %s0, %s176
      %p178 = pneg %p50
      %p179 = pneg %p47
      %p180 = pneg %p71
      %p181 = pneg %p68
      %p182 = pneg %p99
      %p183 = pneg %p96
      %s184 = smul.u32 2, %s20
      %p185 = scmp.lt.s32.totalorder %s19, 1
      %s186 = scalar_select %p185, %s19, 1
      %p187 = scmp.lt.s32.totalorder %s184, 1
      %s188 = scalar_select %p187, %s184, 1
      %s189 = smul.addr %s186, 2
      %s190 = sadd.s32 %s188, %s189
      %s191 = smul.addr %s190, 4
      %s192 = scalar_lea.vmem %s2, %s191
      %p193 = pneg %p127
      %p194 = pneg %p124
      %p195 = scmp.lt.s32.totalorder %s19, 1
      %s196 = scalar_select %p195, %s19, 1
      %p197 = scmp.lt.s32.totalorder %s20, 0
      %s198 = scalar_select %p197, %s20, 0
      %s199 = sadd.s32 %s198, %s196
      %s200 = smul.addr %s199, 8
      %s201 = scalar_lea.vmem %s3, %s200
      %s202 = smul.u32 2, %s20
      %p203 = scmp.lt.s32.totalorder %s19, 1
      %s204 = scalar_select %p203, %s19, 1
      %p205 = scmp.lt.s32.totalorder %s202, 1
      %s206 = scalar_select %p205, %s202, 1
      %s207 = smul.addr %s204, 2
      %s208 = sadd.s32 %s206, %s207
      %s209 = smul.addr %s208, 4
      %s210 = scalar_lea.vmem %s0, %s209
      %s211 = smul.u32 2, %s20
      %s212 = smul.u32 2, %s20
      %p213 = scmp.lt.s32.totalorder %s19, 1
      %s214 = scalar_select %p213, %s19, 1
      %p215 = scmp.lt.s32.totalorder %s212, 1
      %s216 = scalar_select %p215, %s212, 1
      %s217 = smul.addr %s214, 2
      %s218 = sadd.s32 %s216, %s217
      %s219 = smul.addr %s218, 4
      %s220 = scalar_lea.vmem %s2, %s219
      %s221 = smul.u32 2, %s20
      %p222 = scmp.lt.s32.totalorder %s19, 1
      %s223 = scalar_select %p222, %s19, 1
      %p224 = scmp.lt.s32.totalorder %s20, 0
      %s225 = scalar_select %p224, %s20, 0
      %s226 = sadd.s32 %s225, %s223
      %s227 = smul.addr %s226, 8
      %s228 = scalar_lea.vmem %s3, %s227
      %v230 = vld [vmem:[%s210] sm:$0xff]
      %v232 = vcombine.high %v230, %v230
      %v234 = vpack.c.bf16 %v230, %v230
      %v235 = vpack.c.bf16 %v232, %v232
      %v236 = vld [vmem:[%s1] sm:$0xf]
      %vm237 = vcmask 31744
      %v239 = vsel %vm237, %v236, 0
      %vm241 = vcmask 1041408
      %v243 = vsel %vm241, %v234, 0
      %v246 = vsel %vm241, %v235, 0
      %248 = vmatprep.subr.bf16.mxu0 %v246
      %249 = vmatpush1.bf16.msra.mxu0 %v243
      %250 = vmatprep.subr.bf16.mxu0 0
      %251 = vmatpush1.bf16.msra.mxu0 0
      %252 = vmatprep.subr.bf16.mxu0 0
      %253 = vmatpush1.bf16.msra.mxu0 0
      %254 = vmatprep.subr.bf16.mxu0 0
      %255 = vmatpush1.bf16.msra.mxu0 0
      %256 = vmatprep.subr.bf16.mxu0 0
      %257 = vmatpush1.bf16.msra.mxu0 0
      %258 = vmatprep.subr.bf16.mxu0 0
      %259 = vmatpush1.bf16.msra.mxu0 0
      %260 = vmatprep.subr.bf16.mxu0 0
      %261 = vmatpush1.bf16.msra.mxu0 0
      %262 = vmatprep.subr.bf16.mxu0 0
      %263 = vmatpush1.bf16.msra.mxu0 0
      %264 = vmatprep.subr.bf16.mxu0 0
      %265 = vmatpush1.bf16.msra.mxu0 0
      %266 = vmatprep.subr.bf16.mxu0 0
      %267 = vmatpush1.bf16.msra.mxu0 0
      %268 = vmatprep.subr.bf16.mxu0 0
      %269 = vmatpush1.bf16.msra.mxu0 0
      %270 = vmatprep.subr.bf16.mxu0 0
      %271 = vmatpush1.bf16.msra.mxu0 0
      %272 = vmatprep.subr.bf16.mxu0 0
      %273 = vmatpush1.bf16.msra.mxu0 0
      %274 = vmatprep.subr.bf16.mxu0 0
      %275 = vmatpush1.bf16.msra.mxu0 0
      %276 = vmatprep.subr.bf16.mxu0 0
      %277 = vmatpush1.bf16.msra.mxu0 0
      %278 = vmatprep.subr.bf16.mxu0 0
      %279 = vmatpush1.bf16.msra.mxu0 0
      %280 = vmatprep.mubr.bf16.mxu0 0
      %281 = vmatmul.mubr.bf16.gmra.mrb[0].mxu0 %v239
      %v282 = vpop.f32.mrb[0].mxu0
      %v283 = vadd.f32 0.0, %v282
      %v284 = vpop.f32.mrb[0].mxu0
      %v285 = vadd.f32 0.0, %v284
      %v286 = vpop.f32.mrb[0].mxu0
      %v287 = vpop.f32.mrb[0].mxu0
      %288 = vdwg.mxu0
      %v289 = vadd.f32 %v283, %v285
      %290 = vadd.xlane.f32.xlu0 %v289
      %v291 = vpop.xlane.xlu0 %290
      %vm292 = vcmask 7168
      %293 = vst.msk [vmem:[%s228] sm:$0xff] %vm292, %v291
      %v294 = vmul.f32 %v283, %v283
      %v295 = vmul.f32 %v285, %v285
      %v296 = vadd.f32 %v294, %v295
      %297 = vadd.xlane.f32.xlu0 %v296
      %v298 = vpop.xlane.xlu0 %297
      %vm299 = vcmask 15368
      %300 = vst.msk [vmem:[%s228] sm:$0xff] %vm299, %v298
      %v301 = vpack.c.bf16 %v283, %v283
      %v302 = vpack.c.bf16 %v285, %v285
      %v305 = vunpack.c.l.b16 %v301
      %v306 = vunpack.c.l.b16 %v302
      %v307 = vpack.c.b16 %v306, %v305
      %309 = vst [vmem:[%s220] sm:$0xff] %v307
      %s310 = smul.u32 2, %s20
      %p311 = scmp.lt.s32.totalorder %s19, 1
      %s312 = scalar_select %p311, %s19, 1
      %p313 = scmp.lt.s32.totalorder %s310, 1
      %s314 = scalar_select %p313, %s310, 1
      %s315 = smul.addr %s312, 2
      %s316 = sadd.s32 %s314, %s315
      %s317 = smul.addr %s316, 4
      %s318 = scalar_lea.vmem %s2, %s317
      %p319 = scmp.lt.s32.totalorder %s19, 1
      %s320 = scalar_select %p319, %s19, 1
      %p321 = scmp.lt.s32.totalorder %s20, 0
      %s322 = scalar_select %p321, %s20, 0
      %s323 = sadd.s32 %s322, %s320
      %s324 = smul.addr %s323, 8
      %s325 = scalar_lea.vmem %s3, %s324
      // Predicated region
      $region29: #{deep_block_forward.4} parent=27 // pred_check
        %p326 = pneg %p96
      $region30: #{deep_block_forward.4} parent=27 // pred_check_branch
        %328 = sbr.rel (%p326) target = $region32
      $region31: #{deep_block_forward.4} parent=27 // pred_region
        %s329 = smul.u32 2, %s20
      $region32: #{deep_block_forward.4} parent=27 // pred_fallthru
        _
      // Predicated region
      $region33: #{deep_block_forward.4} parent=27 // pred_check
        %p330 = pneg %p124
      $region34: #{deep_block_forward.4} parent=27 // pred_check_branch
        %332 = sbr.rel (%p330) target = $region36
      $region35: #{deep_block_forward.4} parent=27 // pred_region
        _
      $region36: #{deep_block_forward.4} parent=27 // pred_fallthru
        _
    $region28: #{deep_block_forward.4} parent=5 // pred_fallthru
      _
    %p333 = scmp.le.s32.totalorder 2, %s10
    // Predicated region
    $region37: #{deep_block_forward.4} parent=5 // pred_check
      %p334 = pneg %p333
    $region38: #{deep_block_forward.4} parent=5 // pred_check_branch
      %336 = sbr.rel (%p334) target = $region40
    $region39: #{deep_block_forward.4} parent=5 // pred_region
      %s337 = ssub.s32 %s10, 2
      // Predicated region
      $region41: #{deep_block_forward.4} parent=39 // pred_check
        %p338 = pneg %p102
      $region42: #{deep_block_forward.4} parent=39 // pred_check_branch
        %340 = sbr.rel (%p338) target = $region44
      $region43: #{deep_block_forward.4} parent=39 // pred_region
        %s341 = smul.u32 2, %s22
        %p342 = scmp.lt.s32.totalorder %s21, 1
        %s343 = scalar_select %p342, %s21, 1
        %p344 = scmp.lt.s32.totalorder %s341, 1
        %s345 = scalar_select %p344, %s341, 1
        %s346 = smul.addr %s343, 2
        %s347 = sadd.s32 %s345, %s346
        %s348 = smul.addr %s347, 4
        %s349 = scalar_lea.vmem %s2, %s348
      $region44: #{deep_block_forward.4} parent=39 // pred_fallthru
        _
      // Predicated region
      $region45: #{deep_block_forward.4} parent=39 // pred_check
        %p350 = pneg %p130
      $region46: #{deep_block_forward.4} parent=39 // pred_check_branch
        %352 = sbr.rel (%p350) target = $region48
      $region47: #{deep_block_forward.4} parent=39 // pred_region
        %p353 = scmp.lt.s32.totalorder %s21, 1
        %s354 = scalar_select %p353, %s21, 1
        %p355 = scmp.lt.s32.totalorder %s22, 0
        %s356 = scalar_select %p355, %s22, 0
        %s357 = sadd.s32 %s356, %s354
        %s358 = smul.addr %s357, 8
        %s359 = scalar_lea.vmem %s3, %s358
      $region48: #{deep_block_forward.4} parent=39 // pred_fallthru
        _
    $region40: #{deep_block_forward.4} parent=5 // pred_fallthru
      _
  $region6: #{deep_block_forward.4} parent=0 // loop_footer
    %s14 = sadd.s32 1, %s10
  $region7: #{deep_block_forward.4} parent=0 // loop_footer_branch
    %9 = sbr.rel target = $region3
  $region8: #{deep_block_forward.4} parent=0 // loop_exit
    _

// kernel: deep_block_forward.5
$region0: #{deep_block_forward.5}
  #allocation0 [shape = 'u32[]', space=smem, size = 0x4, offset = 0x4, fixed_abs, tag = 'smem constant byte address 0x4 - core index']
  #allocation1 [shape = 'u32[144,128]{1,0:T(1,128)}', space=vmem, size = 0x12000, scoped, tag = 'internal scratch']
  %s0 = inlined_call_operand.vmem [shape: bf16[2,8,256], index: 0, kind: input, shape index: {}]
  %s1 = inlined_call_operand.vmem [shape: f32[8,1], index: 1, kind: input, shape index: {}]
  %s2 = inlined_call_operand.vmem [shape: f32[8,1], index: 2, kind: input, shape index: {}]
  %s3 = inlined_call_operand.vmem [shape: bf16[8,72], index: 3, kind: input, shape index: {}]
  %s4 = inlined_call_operand.vmem [shape: bf16[2,8,256], index: 4, kind: output, shape index: {0}]
  %s5 = inlined_call_operand.vmem [shape: f32[2,8,2], index: 5, kind: output, shape index: {1}]
  %6 = xla_tuple %s4, %s5
  %s7 = sld [smem:[#allocation0]]
  $region57: #{deep_block_forward.5} parent=0
    _
  %s9 = ssub.s32 1, %s7
  %s10 = scalar_select 0, %s9, %s7
  loop: start=0, step=1, limit=4
  $region2: #{deep_block_forward.5} parent=0 // loop_pre_header
    _
  $region3: #{deep_block_forward.5} parent=0 // loop_header
    %s12 = sphi 0, %s16
    %p13 = scmp.ge.s32.totalorder %s12, 4
    %s22 = sphi 0, %s24
    %s25 = sphi 0, %s22
    %s26 = sphi 0, %s25
    %s42 = sphi 0, %s26
    %s46 = sphi 0, %s46
    %s48 = sphi 0, %s46
    %s49 = sphi 0, %s48
    %s63 = sphi 0, %s49
    %s67 = sphi 0, %s67
    %s69 = sphi 0, %s67
    %s70 = sphi 0, %s69
    %s84 = sphi 0, %s70
    %s88 = sphi 0, %s88
    %s90 = sphi 0, %s88
    %s91 = sphi 0, %s90
    %s105 = sphi 0, %s91
    %s111 = sphi 0, %s113
    %s114 = sphi 0, %s111
    %s115 = sphi 0, %s114
    %s131 = sphi 0, %s115
    %s137 = sphi 0, %s139
    %s140 = sphi 0, %s137
    %s141 = sphi 0, %s140
    %s157 = sphi 0, %s141
  $region4: #{deep_block_forward.5} parent=0 // loop_header_branch
    %15 = sbr.rel (%p13) target = $region8
  $region5: #{deep_block_forward.5} parent=0 // loop_body
    %s17 = ssub.s32 %s12, 1
    %s18 = ssub.s32 %s12, 2
    %s19 = sadd.s32 %s12, 1
    %s20 = ssub.s32 %s12, %s19
    %p21 = scmp.eq.s32.totalorder %s20, 0
    %s23 = sadd.s32 %s22, 1
    %s24 = scalar_select %p21, %s22, %s23
    %p27 = pneg %p21
    %p28 = scmp.eq.s32.totalorder %s12, 1
    %p29 = por %p27, %p28
    %p30 = scmp.ne.s32.totalorder %s22, %s25
    %p31 = scmp.eq.s32.totalorder %s12, 0
    %p32 = por %p30, %p31
    %p33 = scmp.ne.s32.totalorder %s22, %s25
    %p34 = scmp.eq.s32.totalorder %s17, 1
    %p35 = por %p33, %p34
    %p36 = scmp.ne.s32.totalorder %s25, %s26
    %p37 = scmp.eq.s32.totalorder %s17, 0
    %p38 = por %p36, %p37
    %p39 = scmp.ne.s32.totalorder %s25, %s26
    %p40 = scmp.eq.s32.totalorder %s18, 1
    %p41 = por %p39, %p40
    %p43 = scmp.ne.s32.totalorder %s26, %s42
    %p44 = scmp.eq.s32.totalorder %s18, 0
    %p45 = por %p43, %p44
    %s47 = sadd.s32 %s46, 1
    %p50 = scmp.eq.s32.totalorder %s12, 1
    %p51 = scmp.ne.s32.totalorder %s46, %s48
    %p52 = scmp.eq.s32.totalorder %s12, 0
    %p53 = por %p51, %p52
    %p54 = scmp.ne.s32.totalorder %s46, %s48
    %p55 = scmp.eq.s32.totalorder %s17, 1
    %p56 = por %p54, %p55
    %p57 = scmp.ne.s32.totalorder %s48, %s49
    %p58 = scmp.eq.s32.totalorder %s17, 0
    %p59 = por %p57, %p58
    %p60 = scmp.ne.s32.totalorder %s48, %s49
    %p61 = scmp.eq.s32.totalorder %s18, 1
    %p62 = por %p60, %p61
    %p64 = scmp.ne.s32.totalorder %s49, %s63
    %p65 = scmp.eq.s32.totalorder %s18, 0
    %p66 = por %p64, %p65
    %s68 = sadd.s32 %s67, 1
    %p71 = scmp.eq.s32.totalorder %s12, 1
    %p72 = scmp.ne.s32.totalorder %s67, %s69
    %p73 = scmp.eq.s32.totalorder %s12, 0
    %p74 = por %p72, %p73
    %p75 = scmp.ne.s32.totalorder %s67, %s69
    %p76 = scmp.eq.s32.totalorder %s17, 1
    %p77 = por %p75, %p76
    %p78 = scmp.ne.s32.totalorder %s69, %s70
    %p79 = scmp.eq.s32.totalorder %s17, 0
    %p80 = por %p78, %p79
    %p81 = scmp.ne.s32.totalorder %s69, %s70
    %p82 = scmp.eq.s32.totalorder %s18, 1
    %p83 = por %p81, %p82
    %p85 = scmp.ne.s32.totalorder %s70, %s84
    %p86 = scmp.eq.s32.totalorder %s18, 0
    %p87 = por %p85, %p86
    %s89 = sadd.s32 %s88, 1
    %p92 = scmp.eq.s32.totalorder %s12, 1
    %p93 = scmp.ne.s32.totalorder %s88, %s90
    %p94 = scmp.eq.s32.totalorder %s12, 0
    %p95 = por %p93, %p94
    %p96 = scmp.ne.s32.totalorder %s88, %s90
    %p97 = scmp.eq.s32.totalorder %s17, 1
    %p98 = por %p96, %p97
    %p99 = scmp.ne.s32.totalorder %s90, %s91
    %p100 = scmp.eq.s32.totalorder %s17, 0
    %p101 = por %p99, %p100
    %p102 = scmp.ne.s32.totalorder %s90, %s91
    %p103 = scmp.eq.s32.totalorder %s18, 1
    %p104 = por %p102, %p103
    %p106 = scmp.ne.s32.totalorder %s91, %s105
    %p107 = scmp.eq.s32.totalorder %s18, 0
    %p108 = por %p106, %p107
    %s109 = ssub.s32 %s12, %s19
    %p110 = scmp.eq.s32.totalorder %s109, 0
    %s112 = sadd.s32 %s111, 1
    %s113 = scalar_select %p110, %s111, %s112
    %p116 = pneg %p110
    %p117 = scmp.eq.s32.totalorder %s12, 1
    %p118 = por %p116, %p117
    %p119 = scmp.ne.s32.totalorder %s111, %s114
    %p120 = scmp.eq.s32.totalorder %s12, 0
    %p121 = por %p119, %p120
    %p122 = scmp.ne.s32.totalorder %s111, %s114
    %p123 = scmp.eq.s32.totalorder %s17, 1
    %p124 = por %p122, %p123
    %p125 = scmp.ne.s32.totalorder %s114, %s115
    %p126 = scmp.eq.s32.totalorder %s17, 0
    %p127 = por %p125, %p126
    %p128 = scmp.ne.s32.totalorder %s114, %s115
    %p129 = scmp.eq.s32.totalorder %s18, 1
    %p130 = por %p128, %p129
    %p132 = scmp.ne.s32.totalorder %s115, %s131
    %p133 = scmp.eq.s32.totalorder %s18, 0
    %p134 = por %p132, %p133
    %s135 = ssub.s32 %s12, %s19
    %p136 = scmp.eq.s32.totalorder %s135, 0
    %s138 = sadd.s32 %s137, 1
    %s139 = scalar_select %p136, %s137, %s138
    %p142 = pneg %p136
    %p143 = scmp.eq.s32.totalorder %s12, 1
    %p144 = por %p142, %p143
    %p145 = scmp.ne.s32.totalorder %s137, %s140
    %p146 = scmp.eq.s32.totalorder %s12, 0
    %p147 = por %p145, %p146
    %p148 = scmp.ne.s32.totalorder %s137, %s140
    %p149 = scmp.eq.s32.totalorder %s17, 1
    %p150 = por %p148, %p149
    %p151 = scmp.ne.s32.totalorder %s140, %s141
    %p152 = scmp.eq.s32.totalorder %s17, 0
    %p153 = por %p151, %p152
    %p154 = scmp.ne.s32.totalorder %s140, %s141
    %p155 = scmp.eq.s32.totalorder %s18, 1
    %p156 = por %p154, %p155
    %p158 = scmp.ne.s32.totalorder %s141, %s157
    %p159 = scmp.eq.s32.totalorder %s18, 0
    %p160 = por %p158, %p159
    %p161 = scmp.le.s32.totalorder 1, %s12
    %p162 = scmp.lt.s32.totalorder %s12, 3
    %p163 = pnand %p161, %p162
    %p164 = pneg %p163
    // Predicated region
    $region9: #{deep_block_forward.5} parent=5 // pred_check
      _
    $region10: #{deep_block_forward.5} parent=5 // pred_check_branch
      %166 = sbr.rel (%p163) target = $region12
    $region11: #{deep_block_forward.5} parent=5 // pred_region
      %s167 = ssub.s32 %s12, 1
      // Predicated region
      $region13: #{deep_block_forward.5} parent=11 // pred_check
        %p168 = pneg %p59
      $region14: #{deep_block_forward.5} parent=11 // pred_check_branch
        %170 = sbr.rel (%p168) target = $region16
      $region15: #{deep_block_forward.5} parent=11 // pred_region
        _
      $region16: #{deep_block_forward.5} parent=11 // pred_fallthru
        _
      // Predicated region
      $region17: #{deep_block_forward.5} parent=11 // pred_check
        %p171 = pneg %p80
      $region18: #{deep_block_forward.5} parent=11 // pred_check_branch
        %173 = sbr.rel (%p171) target = $region20
      $region19: #{deep_block_forward.5} parent=11 // pred_region
        _
      $region20: #{deep_block_forward.5} parent=11 // pred_fallthru
        _
      // Predicated region
      $region21: #{deep_block_forward.5} parent=11 // pred_check
        %p174 = pneg %p101
      $region22: #{deep_block_forward.5} parent=11 // pred_check_branch
        %176 = sbr.rel (%p174) target = $region24
      $region23: #{deep_block_forward.5} parent=11 // pred_region
        _
      $region24: #{deep_block_forward.5} parent=11 // pred_fallthru
        _
    $region12: #{deep_block_forward.5} parent=5 // pred_fallthru
      _
    %p177 = scmp.lt.s32.totalorder %s12, 2
    // Predicated region
    $region25: #{deep_block_forward.5} parent=5 // pred_check
      %p178 = pneg %p177
    $region26: #{deep_block_forward.5} parent=5 // pred_check_branch
      %180 = sbr.rel (%p178) target = $region28
    $region27: #{deep_block_forward.5} parent=5 // pred_region
      // Predicated region
      $region29: #{deep_block_forward.5} parent=27 // pred_check
        %p181 = pneg %p32
      $region30: #{deep_block_forward.5} parent=27 // pred_check_branch
        %183 = sbr.rel (%p181) target = $region32
      $region31: #{deep_block_forward.5} parent=27 // pred_region
        %p184 = scmp.lt.s32.totalorder %s12, 1
        %s185 = scalar_select %p184, %s12, 1
        %s186 = smul.addr %s185, 2
        %s187 = smul.addr %s186, 4
        %s188 = scalar_lea.vmem %s0, %s187
      $region32: #{deep_block_forward.5} parent=27 // pred_fallthru
        _
    $region28: #{deep_block_forward.5} parent=5 // pred_fallthru
      _
    %p189 = scmp.le.s32.totalorder 1, %s12
    %p190 = scmp.lt.s32.totalorder %s12, 3
    %p191 = pnand %p189, %p190
    %p192 = pneg %p191
    // Predicated region
    $region33: #{deep_block_forward.5} parent=5 // pred_check
      _
    $region34: #{deep_block_forward.5} parent=5 // pred_check_branch
      %194 = sbr.rel (%p191) target = $region36
    $region35: #{deep_block_forward.5} parent=5 // pred_region
      %s195 = ssub.s32 %s12, 1
      %p196 = scmp.lt.s32.totalorder %s17, 1
      %s197 = scalar_select %p196, %s17, 1
      %s198 = smul.addr %s197, 2
      %s199 = smul.addr %s198, 4
      %s200 = scalar_lea.vmem %s0, %s199
      %p201 = pneg %p38
      %p202 = pneg %p35
      %p203 = pneg %p59
      %p204 = pneg %p56
      %p205 = pneg %p80
      %p206 = pneg %p77
      %p207 = pneg %p101
      %p208 = pneg %p98
      %p209 = pneg %p127
      %p210 = pneg %p124
      %p211 = scmp.lt.s32.totalorder %s17, 1
      %s212 = scalar_select %p211, %s17, 1
      %s213 = smul.addr %s212, 2
      %s214 = smul.addr %s213, 4
      %s215 = scalar_lea.vmem %s4, %s214
      %p216 = pneg %p153
      %p217 = pneg %p150
      %p218 = scmp.lt.s32.totalorder %s17, 1
      %s219 = scalar_select %p218, %s17, 1
      %s220 = smul.addr %s219, 8
      %s221 = scalar_lea.vmem %s5, %s220
      %p222 = scmp.lt.s32.totalorder %s17, 1
      %s223 = scalar_select %p222, %s17, 1
      %s224 = smul.addr %s223, 2
      %s225 = smul.addr %s224, 4
      %s226 = scalar_lea.vmem %s0, %s225
      %p227 = scmp.lt.s32.totalorder %s17, 1
      %s228 = scalar_select %p227, %s17, 1
      %s229 = smul.addr %s228, 2
      %s230 = smul.addr %s229, 4
      %s231 = scalar_lea.vmem %s4, %s230
      %p232 = scmp.lt.s32.totalorder %s17, 1
      %s233 = scalar_select %p232, %s17, 1
      %s234 = smul.addr %s233, 8
      %s235 = scalar_lea.vmem %s5, %s234
      %v237 = vld [vmem:[%s1] sm:$0xff]
      %v238 = vld [vmem:[%s226] sm:$0xff]
      %v239 = vunpack.c.l.bf16 %v238
      %v240 = vunpack.c.h.bf16 %v238
      %242 = vset.pattern.permute.xlu0 0
      %243 = vperm.xlu0 %242, %v237
      %v244 = vpop.permute.xlu0 %243
      %v246 = vmul.f32 %v244, %v239
      %v247 = vmul.f32 %v244, %v240
      %v248 = vld [vmem:[%s2] sm:$0xff]
      %250 = vset.pattern.permute.xlu0 0
      %251 = vperm.xlu0 %250, %v248
      %v252 = vpop.permute.xlu0 %251
      %v254 = vadd.f32 %v246, %v252
      %v255 = vadd.f32 %v247, %v252
      %v256 = vmax.f32 %v254, 0.0
      %v257 = vmax.f32 %v255, 0.0
      %v258 = vlaneseq
      %v259 = vand.u32 %v258, 127
      %v260 = vadd.s32 %v259, 128
      %vm261 = vcmp.lt.s32.totalorder %v259, 0
      %v262 = vsub.s32 0, %v259
      %v263 = vsel %vm261, %v262, %v259
      %v264 = vshrl.u32 %v263, 4
      %v265 = vand.u32 %v263, 15
      %v266 = vsub.s32 0, %v265
      %v267 = vsel %vm261, %v266, %v265
      %vm268 = vcmp.lt.s32.totalorder %v260, 0
      %v269 = vsub.s32 0, %v260
      %v270 = vsel %vm268, %v269, %v260
      %v271 = vshrl.u32 %v270, 4
      %v272 = vand.u32 %v270, 15
      %v273 = vsub.s32 0, %v272
      %v274 = vsel %vm268, %v273, %v272
      %vm275 = vcmp.ne.s32.totalorder %v267, 0
      %vm276 = vcmp.ne.s32.totalorder %v274, 0
      %vm277 = vcmp.lt.s32.totalorder %v267, 0
      %vm278 = vcmp.lt.s32.totalorder %v274, 0
      %vm279 = vmand %vm277, %vm275
      %vm280 = vmand %vm278, %vm276
      %v281 = vadd.s32 %v267, 16
      %v282 = vadd.s32 %v274, 16
      %v283 = vsel %vm279, %v281, %v267
      %v284 = vsel %vm280, %v282, %v274
      %285 = vrot.lane.b32.xlu0 %v256, 17
      %v286 = vpop.permute.xlu0 %285
      %287 = vrot.lane.b32.xlu0 %v257, 17
      %v288 = vpop.permute.xlu0 %287
      %vm289 = vcmp.lt.s32.totalorder %v259, 17
      %v290 = vsel %vm289, %v286, %v288
      %v291 = vsel %vm289, %v288, %v286
      %vm292 = vcmp.ge.s32.totalorder %v259, 16
      %vm293 = vcmp.ge.s32.totalorder %v260, 16
      %vm294 = vcmp.ge.s32.totalorder %v283, 1
      %vm295 = vcmp.ge.s32.totalorder %v284, 1
      %vm296 = vmand %vm292, %vm294
      %vm297 = vmand %vm293, %vm295
      %v298 = vsel %vm296, 1, 0
      %v299 = vsel %vm297, 1, 0
      %vm300 = vcmp.eq.s32.totalorder %v298, 1
      %vm301 = vcmp.eq.s32.totalorder %v299, 1
      %v302 = vsel %vm300, %v291, 0.0
      %v303 = vsel %vm301, %v290, 0.0
      %304 = vrot.lane.b32.xlu0 %v256, 16
      %v305 = vpop.permute.xlu0 %304
      %306 = vrot.lane.b32.xlu0 %v257, 16
      %v307 = vpop.permute.xlu0 %306
      %vm308 = vcmp.lt.s32.totalorder %v259, 16
      %v309 = vsel %vm308, %v305, %v307
      %v310 = vsel %vm308, %v307, %v305
      %v311 = vsel %vm292, 1, 0
      %v312 = vsel %vm293, 1, 0
      %vm313 = vcmp.eq.s32.totalorder %v311, 1
      %vm314 = vcmp.eq.s32.totalorder %v312, 1
      %v315 = vsel %vm313, %v310, 0.0
      %v316 = vsel %vm314, %v309, 0.0
      %317 = vrot.lane.b32.xlu0 %v256, 15
      %v318 = vpop.permute.xlu0 %317
      %319 = vrot.lane.b32.xlu0 %v257, 15
      %v320 = vpop.permute.xlu0 %319
      %vm321 = vcmp.lt.s32.totalorder %v259, 15
      %v322 = vsel %vm321, %v318, %v320
      %v323 = vsel %vm321, %v320, %v318
      %vm324 = vcmp.lt.s32.totalorder %v283, 15
      %vm325 = vcmp.lt.s32.totalorder %v284, 15
      %vm326 = vmand %vm292, %vm324
      %vm327 = vmand %vm293, %vm325
      %v328 = vsel %vm326, 1, 0
      %v329 = vsel %vm327, 1, 0
      %vm330 = vcmp.eq.s32.totalorder %v328, 1
      %vm331 = vcmp.eq.s32.totalorder %v329, 1
      %v332 = vsel %vm330, %v323, 0.0
      %v333 = vsel %vm331, %v322, 0.0
      %334 = vrot.lane.b32.xlu0 %v256, 1
      %v335 = vpop.permute.xlu0 %334
      %336 = vrot.lane.b32.xlu0 %v257, 1
      %v337 = vpop.permute.xlu0 %336
      %vm338 = vcmp.lt.s32.totalorder %v259, 1
      %v339 = vsel %vm338, %v335, %v337
      %v340 = vsel %vm338, %v337, %v335
      %v341 = vsel %vm294, 1, 0
      %v342 = vsel %vm295, 1, 0
      %vm343 = vcmp.eq.s32.totalorder %v341, 1
      %vm344 = vcmp.eq.s32.totalorder %v342, 1
      %v345 = vsel %vm343, %v340, 0.0
      %v346 = vsel %vm344, %v339, 0.0
      %347 = vrot.lane.b32.xlu0 %v256, 127
      %v348 = vpop.permute.xlu0 %347
      %349 = vrot.lane.b32.xlu0 %v257, 127
      %v350 = vpop.permute.xlu0 %349
      %vm351 = vcmp.lt.s32.totalorder %v259, 127
      %v352 = vsel %vm351, %v348, %v350
      %v353 = vsel %vm351, %v350, %v348
      %v354 = vsel %vm324, 1, 0
      %v355 = vsel %vm325, 1, 0
      %vm356 = vcmp.eq.s32.totalorder %v354, 1
      %vm357 = vcmp.eq.s32.totalorder %v355, 1
      %v358 = vsel %vm356, %v352, 0.0
      %v359 = vsel %vm357, %v353, 0.0
      %360 = vrot.lane.b32.xlu0 %v256, 113
      %v361 = vpop.permute.xlu0 %360
      %362 = vrot.lane.b32.xlu0 %v257, 113
      %v363 = vpop.permute.xlu0 %362
      %vm364 = vcmp.lt.s32.totalorder %v259, 113
      %v365 = vsel %vm364, %v361, %v363
      %v366 = vsel %vm364, %v363, %v361
      %vm367 = vcmp.lt.s32.totalorder %v259, 240
      %vm368 = vcmp.lt.s32.totalorder %v260, 240
      %vm369 = vmand %vm367, %vm294
      %vm370 = vmand %vm368, %vm295
      %v371 = vsel %vm369, 1, 0
      %v372 = vsel %vm370, 1, 0
      %vm373 = vcmp.eq.s32.totalorder %v371, 1
      %vm374 = vcmp.eq.s32.totalorder %v372, 1
      %v375 = vsel %vm373, %v365, 0.0
      %v376 = vsel %vm374, %v366, 0.0
      %377 = vrot.lane.b32.xlu0 %v256, 112
      %v378 = vpop.permute.xlu0 %377
      %379 = vrot.lane.b32.xlu0 %v257, 112
      %v380 = vpop.permute.xlu0 %379
      %vm381 = vcmp.lt.s32.totalorder %v259, 112
      %v382 = vsel %vm381, %v378, %v380
      %v383 = vsel %vm381, %v380, %v378
      %v384 = vsel %vm367, 1, 0
      %v385 = vsel %vm368, 1, 0
      %vm386 = vcmp.eq.s32.totalorder %v384, 1
      %vm387 = vcmp.eq.s32.totalorder %v385, 1
      %v388 = vsel %vm386, %v382, 0.0
      %v389 = vsel %vm387, %v383, 0.0
      %390 = vrot.lane.b32.xlu0 %v256, 111
      %v391 = vpop.permute.xlu0 %390
      %392 = vrot.lane.b32.xlu0 %v257, 111
      %v393 = vpop.permute.xlu0 %392
      %vm394 = vcmp.lt.s32.totalorder %v259, 111
      %v395 = vsel %vm394, %v391, %v393
      %v396 = vsel %vm394, %v393, %v391
      %vm397 = vmand %vm367, %vm324
      %vm398 = vmand %vm368, %vm325
      %v399 = vsel %vm397, 1, 0
      %v400 = vsel %vm398, 1, 0
      %vm401 = vcmp.eq.s32.totalorder %v399, 1
      %vm402 = vcmp.eq.s32.totalorder %v400, 1
      %v403 = vsel %vm401, %v395, 0.0
      %v404 = vsel %vm402, %v396, 0.0
      %v405 = vld [vmem:[%s3] sm:$0xf]
      %v406 = vpack.c.bf16 %v315, %v302
      %v407 = vpack.c.bf16 %v316, %v303
      %v408 = vpack.c.bf16 %v345, %v332
      %v409 = vpack.c.bf16 %v346, %v333
      %v410 = vpack.c.bf16 %v358, %v256
      %v411 = vpack.c.bf16 %v359, %v257
      %v412 = vpack.c.bf16 %v388, %v375
      %v413 = vpack.c.bf16 %v389, %v376
      %v414 = vpack.c.bf16 %v403, %v403
      %v415 = vpack.c.bf16 %v404, %v404
      %vm416 = vcmask 588800
      %v418 = vsel %vm416, %v405, 0
      %vm420 = vcmask 1043456
      %v422 = vsel %vm420, %v414, 0
      %v425 = vsel %vm420, %v415, 0
      %427 = vmatprep.subr.bf16.mxu0 %v407
      %428 = vmatpush1.bf16.msra.mxu0 %v406
      %429 = vmatprep.subr.bf16.mxu0 %v409
      %430 = vmatpush1.bf16.msra.mxu0 %v408
      %431 = vmatprep.subr.bf16.mxu0 %v411
      %432 = vmatpush1.bf16.msra.mxu0 %v410
      %433 = vmatprep.subr.bf16.mxu0 %v413
      %434 = vmatpush1.bf16.msra.mxu0 %v412
      %435 = vmatprep.subr.bf16.mxu0 %v425
      %436 = vmatpush1.bf16.msra.mxu0 %v422
      %437 = vmatprep.subr.bf16.mxu0 0
      %438 = vmatpush1.bf16.msra.mxu0 0
      %439 = vmatprep.subr.bf16.mxu0 0
      %440 = vmatpush1.bf16.msra.mxu0 0
      %441 = vmatprep.subr.bf16.mxu0 0
      %442 = vmatpush1.bf16.msra.mxu0 0
      %443 = vmatprep.subr.bf16.mxu0 0
      %444 = vmatpush1.bf16.msra.mxu0 0
      %445 = vmatprep.subr.bf16.mxu0 0
      %446 = vmatpush1.bf16.msra.mxu0 0
      %447 = vmatprep.subr.bf16.mxu0 0
      %448 = vmatpush1.bf16.msra.mxu0 0
      %449 = vmatprep.subr.bf16.mxu0 0
      %450 = vmatpush1.bf16.msra.mxu0 0
      %451 = vmatprep.subr.bf16.mxu0 0
      %452 = vmatpush1.bf16.msra.mxu0 0
      %453 = vmatprep.subr.bf16.mxu0 0
      %454 = vmatpush1.bf16.msra.mxu0 0
      %455 = vmatprep.subr.bf16.mxu0 0
      %456 = vmatpush1.bf16.msra.mxu0 0
      %457 = vmatprep.subr.bf16.mxu0 0
      %458 = vmatpush1.bf16.msra.mxu0 0
      %459 = vmatprep.mubr.bf16.mxu0 0
      %460 = vmatmul.mubr.bf16.gmra.mrb[0].mxu0 %v418
      %v461 = vpop.f32.mrb[0].mxu0
      %v462 = vadd.f32 0.0, %v461
      %v463 = vpop.f32.mrb[0].mxu0
      %v464 = vadd.f32 0.0, %v463
      %v465 = vpop.f32.mrb[0].mxu0
      %v466 = vpop.f32.mrb[0].mxu0
      %467 = vdwg.mxu0
      %v468 = vadd.f32 %v462, %v464
      %469 = vadd.xlane.f32.xlu0 %v468
      %v470 = vpop.xlane.xlu0 %469
      %vm471 = vcmask 7168
      %472 = vst.msk [vmem:[%s235] sm:$0xff] %vm471, %v470
      %v473 = vmul.f32 %v462, %v462
      %v474 = vmul.f32 %v464, %v464
      %v475 = vadd.f32 %v473, %v474
      %476 = vadd.xlane.f32.xlu0 %v475
      %v477 = vpop.xlane.xlu0 %476
      %vm478 = vcmask 15368
      %479 = vst.msk [vmem:[%s235] sm:$0xff] %vm478, %v477
      %v480 = vpack.c.bf16 %v462, %v462
      %v481 = vpack.c.bf16 %v464, %v464
      %v484 = vunpack.c.l.b16 %v480
      %v485 = vunpack.c.l.b16 %v481
      %v486 = vpack.c.b16 %v485, %v484
      %488 = vst [vmem:[%s231] sm:$0xff] %v486
      %p489 = scmp.lt.s32.totalorder %s17, 1
      %s490 = scalar_select %p489, %s17, 1
      %s491 = smul.addr %s490, 2
      %s492 = smul.addr %s491, 4
      %s493 = scalar_lea.vmem %s4, %s492
      %p494 = scmp.lt.s32.totalorder %s17, 1
      %s495 = scalar_select %p494, %s17, 1
      %s496 = smul.addr %s495, 8
      %s497 = scalar_lea.vmem %s5, %s496
      // Predicated region
      $region37: #{deep_block_forward.5} parent=35 // pred_check
        %p498 = pneg %p124
      $region38: #{deep_block_forward.5} parent=35 // pred_check_branch
        %500 = sbr.rel (%p498) target = $region40
      $region39: #{deep_block_forward.5} parent=35 // pred_region
        _
      $region40: #{deep_block_forward.5} parent=35 // pred_fallthru
        _
      // Predicated region
      $region41: #{deep_block_forward.5} parent=35 // pred_check
        %p501 = pneg %p150
      $region42: #{deep_block_forward.5} parent=35 // pred_check_branch
        %503 = sbr.rel (%p501) target = $region44
      $region43: #{deep_block_forward.5} parent=35 // pred_region
        _
      $region44: #{deep_block_forward.5} parent=35 // pred_fallthru
        _
    $region36: #{deep_block_forward.5} parent=5 // pred_fallthru
      _
    %p504 = scmp.le.s32.totalorder 2, %s12
    // Predicated region
    $region45: #{deep_block_forward.5} parent=5 // pred_check
      %p505 = pneg %p504
    $region46: #{deep_block_forward.5} parent=5 // pred_check_branch
      %507 = sbr.rel (%p505) target = $region48
    $region47: #{deep_block_forward.5} parent=5 // pred_region
      %s508 = ssub.s32 %s12, 2
      // Predicated region
      $region49: #{deep_block_forward.5} parent=47 // pred_check
        %p509 = pneg %p130
      $region50: #{deep_block_forward.5} parent=47 // pred_check_branch
        %511 = sbr.rel (%p509) target = $region52
      $region51: #{deep_block_forward.5} parent=47 // pred_region
        %p512 = scmp.lt.s32.totalorder %s18, 1
        %s513 = scalar_select %p512, %s18, 1
        %s514 = smul.addr %s513, 2
        %s515 = smul.addr %s514, 4
        %s516 = scalar_lea.vmem %s4, %s515
      $region52: #{deep_block_forward.5} parent=47 // pred_fallthru
        _
      // Predicated region
      $region53: #{deep_block_forward.5} parent=47 // pred_check
        %p517 = pneg %p156
      $region54: #{deep_block_forward.5} parent=47 // pred_check_branch
        %519 = sbr.rel (%p517) target = $region56
      $region55: #{deep_block_forward.5} parent=47 // pred_region
        %p520 = scmp.lt.s32.totalorder %s18, 1
        %s521 = scalar_select %p520, %s18, 1
        %s522 = smul.addr %s521, 8
        %s523 = scalar_lea.vmem %s5, %s522
      $region56: #{deep_block_forward.5} parent=47 // pred_fallthru
        _
    $region48: #{deep_block_forward.5} parent=5 // pred_fallthru
      _
  $region6: #{deep_block_forward.5} parent=0 // loop_footer
    %s16 = sadd.s32 1, %s12
  $region7: #{deep_block_forward.5} parent=0 // loop_footer_branch
    %11 = sbr.rel target = $region3
  $region8: #{deep_block_forward.5} parent=0 // loop_exit
    _

// kernel: deep_block_forward.6
$region0: #{deep_block_forward.6}
  #allocation0 [shape = 'u32[]', space=smem, size = 0x4, offset = 0x4, fixed_abs, tag = 'smem constant byte address 0x4 - core index']
  #allocation1 [shape = 'u32[144,128]{1,0:T(1,128)}', space=vmem, size = 0x12000, scoped, tag = 'internal scratch']
  %s0 = inlined_call_operand.vmem [shape: bf16[2,8,256], index: 0, kind: input, shape index: {}]
  %s1 = inlined_call_operand.vmem [shape: f32[8,1], index: 1, kind: input, shape index: {}]
  %s2 = inlined_call_operand.vmem [shape: f32[8,1], index: 2, kind: input, shape index: {}]
  %s3 = inlined_call_operand.vmem [shape: bf16[32,8], index: 3, kind: input, shape index: {}]
  %s4 = inlined_call_operand.vmem [shape: f32[2,4,256], index: 4, kind: input, shape index: {}]
  %s5 = inlined_call_operand.vmem [shape: bf16[32,4], index: 5, kind: input, shape index: {}]
  %s6 = inlined_call_operand.vmem [shape: bf16[2,32,256], index: 6, kind: output, shape index: {0}]
  %s7 = inlined_call_operand.vmem [shape: bf16[2,32,256], index: 7, kind: output, shape index: {1}]
  %s8 = inlined_call_operand.vmem [shape: f32[2,1,32,2], index: 8, kind: output, shape index: {2}]
  %s9 = inlined_call_operand.vmem [shape: f32[2,1,32,2], index: 9, kind: output, shape index: {3}]
  %10 = xla_tuple %s6, %s7, %s8, %s9
  %s11 = sld [smem:[#allocation0]]
  $region81: #{deep_block_forward.6} parent=0
    _
  %s13 = ssub.s32 1, %s11
  %s14 = scalar_select 0, %s13, %s11
  loop: start=0, step=1, limit=4
  $region2: #{deep_block_forward.6} parent=0 // loop_pre_header
    _
  $region3: #{deep_block_forward.6} parent=0 // loop_header
    %s16 = sphi 0, %s20
    %p17 = scmp.ge.s32.totalorder %s16, 4
    %s23 = sphi 0, %s35
    %s24 = sphi 0, %s31
    %s25 = sphi 0, %s23
    %s26 = sphi 0, %s24
    %s27 = sphi 0, %s25
    %s28 = sphi 0, %s26
    %s40 = sphi 0, %s42
    %s43 = sphi 0, %s40
    %s44 = sphi 0, %s43
    %s60 = sphi 0, %s44
    %s64 = sphi 0, %s64
    %s66 = sphi 0, %s64
    %s67 = sphi 0, %s66
    %s81 = sphi 0, %s67
    %s85 = sphi 0, %s85
    %s87 = sphi 0, %s85
    %s88 = sphi 0, %s87
    %s102 = sphi 0, %s88
    %s106 = sphi 0, %s106
    %s108 = sphi 0, %s106
    %s109 = sphi 0, %s108
    %s123 = sphi 0, %s109
    %s131 = sphi 0, %s133
    %s134 = sphi 0, %s131
    %s135 = sphi 0, %s134
    %s151 = sphi 0, %s135
    %s155 = sphi 0, %s155
    %s157 = sphi 0, %s155
    %s158 = sphi 0, %s157
    %s172 = sphi 0, %s158
    %s180 = sphi 0, %s182
    %s183 = sphi 0, %s180
    %s184 = sphi 0, %s183
    %s200 = sphi 0, %s184
    %s208 = sphi 0, %s210
    %s211 = sphi 0, %s208
    %s212 = sphi 0, %s211
    %s228 = sphi 0, %s212
    %s236 = sphi 0, %s238
    %s239 = sphi 0, %s236
    %s240 = sphi 0, %s239
    %s256 = sphi 0, %s240
    %s264 = sphi 0, %s266
    %s267 = sphi 0, %s264
    %s268 = sphi 0, %s267
    %s284 = sphi 0, %s268
  $region4: #{deep_block_forward.6} parent=0 // loop_header_branch
    %19 = sbr.rel (%p17) target = $region8
  $region5: #{deep_block_forward.6} parent=0 // loop_body
    %s21 = ssub.s32 %s16, 1
    %s22 = ssub.s32 %s16, 2
    %s29 = sadd.s32 1, %s24
    %p30 = scmp.ge.s32.totalorder %s29, 1
    %s31 = scalar_select %p30, 0, %s29
    %s32 = sadd.s32 1, %s23
    %s33 = scalar_select %p30, %s32, %s23
    %p34 = scmp.ge.s32.totalorder %s33, 2
    %s35 = scalar_select %p34, 0, %s33
    %s36 = ssub.s32 %s23, %s35
    %s37 = ssub.s32 %s24, %s31
    %s38 = sor.u32 %s36, %s37
    %p39 = scmp.eq.s32.totalorder %s38, 0
    %s41 = sadd.s32 %s40, 1
    %s42 = scalar_select %p39, %s40, %s41
    %p45 = pneg %p39
    %p46 = scmp.eq.s32.totalorder %s16, 1
    %p47 = por %p45, %p46
    %p48 = scmp.ne.s32.totalorder %s40, %s43
    %p49 = scmp.eq.s32.totalorder %s16, 0
    %p50 = por %p48, %p49
    %p51 = scmp.ne.s32.totalorder %s40, %s43
    %p52 = scmp.eq.s32.totalorder %s21, 1
    %p53 = por %p51, %p52
    %p54 = scmp.ne.s32.totalorder %s43, %s44
    %p55 = scmp.eq.s32.totalorder %s21, 0
    %p56 = por %p54, %p55
    %p57 = scmp.ne.s32.totalorder %s43, %s44
    %p58 = scmp.eq.s32.totalorder %s22, 1
    %p59 = por %p57, %p58
    %p61 = scmp.ne.s32.totalorder %s44, %s60
    %p62 = scmp.eq.s32.totalorder %s22, 0
    %p63 = por %p61, %p62
    %s65 = sadd.s32 %s64, 1
    %p68 = scmp.eq.s32.totalorder %s16, 1
    %p69 = scmp.ne.s32.totalorder %s64, %s66
    %p70 = scmp.eq.s32.totalorder %s16, 0
    %p71 = por %p69, %p70
    %p72 = scmp.ne.s32.totalorder %s64, %s66
    %p73 = scmp.eq.s32.totalorder %s21, 1
    %p74 = por %p72, %p73
    %p75 = scmp.ne.s32.totalorder %s66, %s67
    %p76 = scmp.eq.s32.totalorder %s21, 0
    %p77 = por %p75, %p76
    %p78 = scmp.ne.s32.totalorder %s66, %s67
    %p79 = scmp.eq.s32.totalorder %s22, 1
    %p80 = por %p78, %p79
    %p82 = scmp.ne.s32.totalorder %s67, %s81
    %p83 = scmp.eq.s32.totalorder %s22, 0
    %p84 = por %p82, %p83
    %s86 = sadd.s32 %s85, 1
    %p89 = scmp.eq.s32.totalorder %s16, 1
    %p90 = scmp.ne.s32.totalorder %s85, %s87
    %p91 = scmp.eq.s32.totalorder %s16, 0
    %p92 = por %p90, %p91
    %p93 = scmp.ne.s32.totalorder %s85, %s87
    %p94 = scmp.eq.s32.totalorder %s21, 1
    %p95 = por %p93, %p94
    %p96 = scmp.ne.s32.totalorder %s87, %s88
    %p97 = scmp.eq.s32.totalorder %s21, 0
    %p98 = por %p96, %p97
    %p99 = scmp.ne.s32.totalorder %s87, %s88
    %p100 = scmp.eq.s32.totalorder %s22, 1
    %p101 = por %p99, %p100
    %p103 = scmp.ne.s32.totalorder %s88, %s102
    %p104 = scmp.eq.s32.totalorder %s22, 0
    %p105 = por %p103, %p104
    %s107 = sadd.s32 %s106, 1
    %p110 = scmp.eq.s32.totalorder %s16, 1
    %p111 = scmp.ne.s32.totalorder %s106, %s108
    %p112 = scmp.eq.s32.totalorder %s16, 0
    %p113 = por %p111, %p112
    %p114 = scmp.ne.s32.totalorder %s106, %s108
    %p115 = scmp.eq.s32.totalorder %s21, 1
    %p116 = por %p114, %p115
    %p117 = scmp.ne.s32.totalorder %s108, %s109
    %p118 = scmp.eq.s32.totalorder %s21, 0
    %p119 = por %p117, %p118
    %p120 = scmp.ne.s32.totalorder %s108, %s109
    %p121 = scmp.eq.s32.totalorder %s22, 1
    %p122 = por %p120, %p121
    %p124 = scmp.ne.s32.totalorder %s109, %s123
    %p125 = scmp.eq.s32.totalorder %s22, 0
    %p126 = por %p124, %p125
    %s127 = ssub.s32 %s23, %s35
    %s128 = ssub.s32 %s24, %s31
    %s129 = sor.u32 %s127, %s128
    %p130 = scmp.eq.s32.totalorder %s129, 0
    %s132 = sadd.s32 %s131, 1
    %s133 = scalar_select %p130, %s131, %s132
    %p136 = pneg %p130
    %p137 = scmp.eq.s32.totalorder %s16, 1
    %p138 = por %p136, %p137
    %p139 = scmp.ne.s32.totalorder %s131, %s134
    %p140 = scmp.eq.s32.totalorder %s16, 0
    %p141 = por %p139, %p140
    %p142 = scmp.ne.s32.totalorder %s131, %s134
    %p143 = scmp.eq.s32.totalorder %s21, 1
    %p144 = por %p142, %p143
    %p145 = scmp.ne.s32.totalorder %s134, %s135
    %p146 = scmp.eq.s32.totalorder %s21, 0
    %p147 = por %p145, %p146
    %p148 = scmp.ne.s32.totalorder %s134, %s135
    %p149 = scmp.eq.s32.totalorder %s22, 1
    %p150 = por %p148, %p149
    %p152 = scmp.ne.s32.totalorder %s135, %s151
    %p153 = scmp.eq.s32.totalorder %s22, 0
    %p154 = por %p152, %p153
    %s156 = sadd.s32 %s155, 1
    %p159 = scmp.eq.s32.totalorder %s16, 1
    %p160 = scmp.ne.s32.totalorder %s155, %s157
    %p161 = scmp.eq.s32.totalorder %s16, 0
    %p162 = por %p160, %p161
    %p163 = scmp.ne.s32.totalorder %s155, %s157
    %p164 = scmp.eq.s32.totalorder %s21, 1
    %p165 = por %p163, %p164
    %p166 = scmp.ne.s32.totalorder %s157, %s158
    %p167 = scmp.eq.s32.totalorder %s21, 0
    %p168 = por %p166, %p167
    %p169 = scmp.ne.s32.totalorder %s157, %s158
    %p170 = scmp.eq.s32.totalorder %s22, 1
    %p171 = por %p169, %p170
    %p173 = scmp.ne.s32.totalorder %s158, %s172
    %p174 = scmp.eq.s32.totalorder %s22, 0
    %p175 = por %p173, %p174
    %s176 = ssub.s32 %s23, %s35
    %s177 = ssub.s32 %s24, %s31
    %s178 = sor.u32 %s176, %s177
    %p179 = scmp.eq.s32.totalorder %s178, 0
    %s181 = sadd.s32 %s180, 1
    %s182 = scalar_select %p179, %s180, %s181
    %p185 = pneg %p179
    %p186 = scmp.eq.s32.totalorder %s16, 1
    %p187 = por %p185, %p186
    %p188 = scmp.ne.s32.totalorder %s180, %s183
    %p189 = scmp.eq.s32.totalorder %s16, 0
    %p190 = por %p188, %p189
    %p191 = scmp.ne.s32.totalorder %s180, %s183
    %p192 = scmp.eq.s32.totalorder %s21, 1
    %p193 = por %p191, %p192
    %p194 = scmp.ne.s32.totalorder %s183, %s184
    %p195 = scmp.eq.s32.totalorder %s21, 0
    %p196 = por %p194, %p195
    %p197 = scmp.ne.s32.totalorder %s183, %s184
    %p198 = scmp.eq.s32.totalorder %s22, 1
    %p199 = por %p197, %p198
    %p201 = scmp.ne.s32.totalorder %s184, %s200
    %p202 = scmp.eq.s32.totalorder %s22, 0
    %p203 = por %p201, %p202
    %s204 = ssub.s32 %s23, %s35
    %s205 = ssub.s32 %s24, %s31
    %s206 = sor.u32 %s204, %s205
    %p207 = scmp.eq.s32.totalorder %s206, 0
    %s209 = sadd.s32 %s208, 1
    %s210 = scalar_select %p207, %s208, %s209
    %p213 = pneg %p207
    %p214 = scmp.eq.s32.totalorder %s16, 1
    %p215 = por %p213, %p214
    %p216 = scmp.ne.s32.totalorder %s208, %s211
    %p217 = scmp.eq.s32.totalorder %s16, 0
    %p218 = por %p216, %p217
    %p219 = scmp.ne.s32.totalorder %s208, %s211
    %p220 = scmp.eq.s32.totalorder %s21, 1
    %p221 = por %p219, %p220
    %p222 = scmp.ne.s32.totalorder %s211, %s212
    %p223 = scmp.eq.s32.totalorder %s21, 0
    %p224 = por %p222, %p223
    %p225 = scmp.ne.s32.totalorder %s211, %s212
    %p226 = scmp.eq.s32.totalorder %s22, 1
    %p227 = por %p225, %p226
    %p229 = scmp.ne.s32.totalorder %s212, %s228
    %p230 = scmp.eq.s32.totalorder %s22, 0
    %p231 = por %p229, %p230
    %s232 = ssub.s32 %s23, %s35
    %s233 = ssub.s32 %s24, %s31
    %s234 = sor.u32 %s232, %s233
    %p235 = scmp.eq.s32.totalorder %s234, 0
    %s237 = sadd.s32 %s236, 1
    %s238 = scalar_select %p235, %s236, %s237
    %p241 = pneg %p235
    %p242 = scmp.eq.s32.totalorder %s16, 1
    %p243 = por %p241, %p242
    %p244 = scmp.ne.s32.totalorder %s236, %s239
    %p245 = scmp.eq.s32.totalorder %s16, 0
    %p246 = por %p244, %p245
    %p247 = scmp.ne.s32.totalorder %s236, %s239
    %p248 = scmp.eq.s32.totalorder %s21, 1
    %p249 = por %p247, %p248
    %p250 = scmp.ne.s32.totalorder %s239, %s240
    %p251 = scmp.eq.s32.totalorder %s21, 0
    %p252 = por %p250, %p251
    %p253 = scmp.ne.s32.totalorder %s239, %s240
    %p254 = scmp.eq.s32.totalorder %s22, 1
    %p255 = por %p253, %p254
    %p257 = scmp.ne.s32.totalorder %s240, %s256
    %p258 = scmp.eq.s32.totalorder %s22, 0
    %p259 = por %p257, %p258
    %s260 = ssub.s32 %s23, %s35
    %s261 = ssub.s32 %s24, %s31
    %s262 = sor.u32 %s260, %s261
    %p263 = scmp.eq.s32.totalorder %s262, 0
    %s265 = sadd.s32 %s264, 1
    %s266 = scalar_select %p263, %s264, %s265
    %p269 = pneg %p263
    %p270 = scmp.eq.s32.totalorder %s16, 1
    %p271 = por %p269, %p270
    %p272 = scmp.ne.s32.totalorder %s264, %s267
    %p273 = scmp.eq.s32.totalorder %s16, 0
    %p274 = por %p272, %p273
    %p275 = scmp.ne.s32.totalorder %s264, %s267
    %p276 = scmp.eq.s32.totalorder %s21, 1
    %p277 = por %p275, %p276
    %p278 = scmp.ne.s32.totalorder %s267, %s268
    %p279 = scmp.eq.s32.totalorder %s21, 0
    %p280 = por %p278, %p279
    %p281 = scmp.ne.s32.totalorder %s267, %s268
    %p282 = scmp.eq.s32.totalorder %s22, 1
    %p283 = por %p281, %p282
    %p285 = scmp.ne.s32.totalorder %s268, %s284
    %p286 = scmp.eq.s32.totalorder %s22, 0
    %p287 = por %p285, %p286
    %p288 = scmp.le.s32.totalorder 1, %s16
    %p289 = scmp.lt.s32.totalorder %s16, 3
    %p290 = pnand %p288, %p289
    %p291 = pneg %p290
    // Predicated region
    $region9: #{deep_block_forward.6} parent=5 // pred_check
      _
    $region10: #{deep_block_forward.6} parent=5 // pred_check_branch
      %293 = sbr.rel (%p290) target = $region12
    $region11: #{deep_block_forward.6} parent=5 // pred_region
      %s294 = ssub.s32 %s16, 1
      // Predicated region
      $region13: #{deep_block_forward.6} parent=11 // pred_check
        %p295 = pneg %p77
      $region14: #{deep_block_forward.6} parent=11 // pred_check_branch
        %297 = sbr.rel (%p295) target = $region16
      $region15: #{deep_block_forward.6} parent=11 // pred_region
        _
      $region16: #{deep_block_forward.6} parent=11 // pred_fallthru
        _
      // Predicated region
      $region17: #{deep_block_forward.6} parent=11 // pred_check
        %p298 = pneg %p98
      $region18: #{deep_block_forward.6} parent=11 // pred_check_branch
        %300 = sbr.rel (%p298) target = $region20
      $region19: #{deep_block_forward.6} parent=11 // pred_region
        _
      $region20: #{deep_block_forward.6} parent=11 // pred_fallthru
        _
      // Predicated region
      $region21: #{deep_block_forward.6} parent=11 // pred_check
        %p301 = pneg %p119
      $region22: #{deep_block_forward.6} parent=11 // pred_check_branch
        %303 = sbr.rel (%p301) target = $region24
      $region23: #{deep_block_forward.6} parent=11 // pred_region
        _
      $region24: #{deep_block_forward.6} parent=11 // pred_fallthru
        _
      // Predicated region
      $region25: #{deep_block_forward.6} parent=11 // pred_check
        %p304 = pneg %p168
      $region26: #{deep_block_forward.6} parent=11 // pred_check_branch
        %306 = sbr.rel (%p304) target = $region28
      $region27: #{deep_block_forward.6} parent=11 // pred_region
        _
      $region28: #{deep_block_forward.6} parent=11 // pred_fallthru
        _
    $region12: #{deep_block_forward.6} parent=5 // pred_fallthru
      _
    %p307 = scmp.lt.s32.totalorder %s16, 2
    // Predicated region
    $region29: #{deep_block_forward.6} parent=5 // pred_check
      %p308 = pneg %p307
    $region30: #{deep_block_forward.6} parent=5 // pred_check_branch
      %310 = sbr.rel (%p308) target = $region32
    $region31: #{deep_block_forward.6} parent=5 // pred_region
      // Predicated region
      $region33: #{deep_block_forward.6} parent=31 // pred_check
        %p311 = pneg %p50
      $region34: #{deep_block_forward.6} parent=31 // pred_check_branch
        %313 = sbr.rel (%p311) target = $region36
      $region35: #{deep_block_forward.6} parent=31 // pred_region
        %s314 = smul.u32 2, %s24
        %p315 = scmp.lt.s32.totalorder %s23, 1
        %s316 = scalar_select %p315, %s23, 1
        %p317 = scmp.lt.s32.totalorder %s314, 1
        %s318 = scalar_select %p317, %s314, 1
        %s319 = smul.addr %s316, 2
        %s320 = sadd.s32 %s318, %s319
        %s321 = smul.addr %s320, 4
        %s322 = scalar_lea.vmem %s0, %s321
        %s323 = smul.u32 2, %s24
      $region36: #{deep_block_forward.6} parent=31 // pred_fallthru
        _
      // Predicated region
      $region37: #{deep_block_forward.6} parent=31 // pred_check
        %p324 = pneg %p141
      $region38: #{deep_block_forward.6} parent=31 // pred_check_branch
        %326 = sbr.rel (%p324) target = $region40
      $region39: #{deep_block_forward.6} parent=31 // pred_region
        %s327 = smul.u32 2, %s24
        %p328 = scmp.lt.s32.totalorder %s23, 1
        %s329 = scalar_select %p328, %s23, 1
        %p330 = scmp.lt.s32.totalorder %s327, 1
        %s331 = scalar_select %p330, %s327, 1
        %s332 = smul.addr %s329, 2
        %s333 = sadd.s32 %s331, %s332
        %s334 = smul.addr %s333, 4
        %s335 = scalar_lea.vmem %s4, %s334
        %s336 = smul.u32 2, %s24
      $region40: #{deep_block_forward.6} parent=31 // pred_fallthru
        _
    $region32: #{deep_block_forward.6} parent=5 // pred_fallthru
      _
    %p337 = scmp.le.s32.totalorder 1, %s16
    %p338 = scmp.lt.s32.totalorder %s16, 3
    %p339 = pnand %p337, %p338
    %p340 = pneg %p339
    // Predicated region
    $region41: #{deep_block_forward.6} parent=5 // pred_check
      _
    $region42: #{deep_block_forward.6} parent=5 // pred_check_branch
      %342 = sbr.rel (%p339) target = $region44
    $region43: #{deep_block_forward.6} parent=5 // pred_region
      %s343 = ssub.s32 %s16, 1
      %s344 = smul.u32 2, %s26
      %p345 = scmp.lt.s32.totalorder %s25, 1
      %s346 = scalar_select %p345, %s25, 1
      %p347 = scmp.lt.s32.totalorder %s344, 1
      %s348 = scalar_select %p347, %s344, 1
      %s349 = smul.addr %s346, 2
      %s350 = sadd.s32 %s348, %s349
      %s351 = smul.addr %s350, 4
      %s352 = scalar_lea.vmem %s0, %s351
      %p353 = pneg %p56
      %p354 = pneg %p53
      %p355 = pneg %p77
      %p356 = pneg %p74
      %p357 = pneg %p98
      %p358 = pneg %p95
      %p359 = pneg %p119
      %p360 = pneg %p116
      %s361 = smul.u32 2, %s26
      %p362 = scmp.lt.s32.totalorder %s25, 1
      %s363 = scalar_select %p362, %s25, 1
      %p364 = scmp.lt.s32.totalorder %s361, 1
      %s365 = scalar_select %p364, %s361, 1
      %s366 = smul.addr %s363, 2
      %s367 = sadd.s32 %s365, %s366
      %s368 = smul.addr %s367, 4
      %s369 = scalar_lea.vmem %s4, %s368
      %p370 = pneg %p147
      %p371 = pneg %p144
      %p372 = pneg %p168
      %p373 = pneg %p165
      %p374 = pneg %p196
      %p375 = pneg %p193
      %s376 = smul.u32 2, %s26
      %p377 = scmp.lt.s32.totalorder %s25, 1
      %s378 = scalar_select %p377, %s25, 1
      %p379 = scmp.lt.s32.totalorder %s376, 1
      %s380 = scalar_select %p379, %s376, 1
      %s381 = smul.addr %s378, 8
      %s382 = sadd.s32 %s380, %s381
      %s383 = smul.addr %s382, 4
      %s384 = scalar_lea.vmem %s6, %s383
      %p385 = pneg %p224
      %p386 = pneg %p221
      %s387 = smul.u32 2, %s26
      %p388 = scmp.lt.s32.totalorder %s25, 1
      %s389 = scalar_select %p388, %s25, 1
      %p390 = scmp.lt.s32.totalorder %s387, 1
      %s391 = scalar_select %p390, %s387, 1
      %s392 = smul.addr %s389, 8
      %s393 = sadd.s32 %s391, %s392
      %s394 = smul.addr %s393, 4
      %s395 = scalar_lea.vmem %s7, %s394
      %p396 = pneg %p252
      %p397 = pneg %p249
      %p398 = scmp.lt.s32.totalorder %s25, 1
      %s399 = scalar_select %p398, %s25, 1
      %p400 = scmp.lt.s32.totalorder %s26, 0
      %s401 = scalar_select %p400, %s26, 0
      %s402 = smul.addr %s401, 4
      %s403 = smul.addr %s399, 4
      %s404 = sadd.s32 %s402, %s403
      %s405 = smul.addr %s404, 8
      %s406 = scalar_lea.vmem %s8, %s405
      %p407 = pneg %p280
      %p408 = pneg %p277
      %p409 = scmp.lt.s32.totalorder %s25, 1
      %s410 = scalar_select %p409, %s25, 1
      %p411 = scmp.lt.s32.totalorder %s26, 0
      %s412 = scalar_select %p411, %s26, 0
      %s413 = smul.addr %s412, 4
      %s414 = smul.addr %s410, 4
      %s415 = sadd.s32 %s413, %s414
      %s416 = smul.addr %s415, 8
      %s417 = scalar_lea.vmem %s9, %s416
      %s418 = smul.u32 2, %s26
      %p419 = scmp.lt.s32.totalorder %s25, 1
      %s420 = scalar_select %p419, %s25, 1
      %p421 = scmp.lt.s32.totalorder %s418, 1
      %s422 = scalar_select %p421, %s418, 1
      %s423 = smul.addr %s420, 2
      %s424 = sadd.s32 %s422, %s423
      %s425 = smul.addr %s424, 4
      %s426 = scalar_lea.vmem %s0, %s425
      %s427 = smul.u32 2, %s26
      %s428 = smul.u32 2, %s26
      %p429 = scmp.lt.s32.totalorder %s25, 1
      %s430 = scalar_select %p429, %s25, 1
      %p431 = scmp.lt.s32.totalorder %s428, 1
      %s432 = scalar_select %p431, %s428, 1
      %s433 = smul.addr %s430, 2
      %s434 = sadd.s32 %s432, %s433
      %s435 = smul.addr %s434, 4
      %s436 = scalar_lea.vmem %s4, %s435
      %s437 = smul.u32 2, %s26
      %s438 = smul.u32 2, %s26
      %p439 = scmp.lt.s32.totalorder %s25, 1
      %s440 = scalar_select %p439, %s25, 1
      %p441 = scmp.lt.s32.totalorder %s438, 1
      %s442 = scalar_select %p441, %s438, 1
      %s443 = smul.addr %s440, 8
      %s444 = sadd.s32 %s442, %s443
      %s445 = smul.addr %s444, 4
      %s446 = scalar_lea.vmem %s6, %s445
      %s447 = smul.u32 2, %s26
      %s448 = smul.u32 2, %s26
      %p449 = scmp.lt.s32.totalorder %s25, 1
      %s450 = scalar_select %p449, %s25, 1
      %p451 = scmp.lt.s32.totalorder %s448, 1
      %s452 = scalar_select %p451, %s448, 1
      %s453 = smul.addr %s450, 8
      %s454 = sadd.s32 %s452, %s453
      %s455 = smul.addr %s454, 4
      %s456 = scalar_lea.vmem %s7, %s455
      %s457 = smul.u32 2, %s26
      %p458 = scmp.lt.s32.totalorder %s25, 1
      %s459 = scalar_select %p458, %s25, 1
      %p460 = scmp.lt.s32.totalorder %s26, 0
      %s461 = scalar_select %p460, %s26, 0
      %s462 = smul.addr %s461, 4
      %s463 = smul.addr %s459, 4
      %s464 = sadd.s32 %s462, %s463
      %s465 = smul.addr %s464, 8
      %s466 = scalar_lea.vmem %s8, %s465
      %p467 = scmp.lt.s32.totalorder %s25, 1
      %s468 = scalar_select %p467, %s25, 1
      %p469 = scmp.lt.s32.totalorder %s26, 0
      %s470 = scalar_select %p469, %s26, 0
      %s471 = smul.addr %s470, 4
      %s472 = smul.addr %s468, 4
      %s473 = sadd.s32 %s471, %s472
      %s474 = smul.addr %s473, 8
      %s475 = scalar_lea.vmem %s9, %s474
      %v477 = vld [vmem:[%s1] sm:$0xff]
      %v478 = vld [vmem:[%s426] sm:$0xff]
      %v479 = vunpack.c.l.bf16 %v478
      %v480 = vunpack.c.h.bf16 %v478
      %482 = vset.pattern.permute.xlu0 0
      %483 = vperm.xlu0 %482, %v477
      %v484 = vpop.permute.xlu0 %483
      %v486 = vmul.f32 %v484, %v479
      %v487 = vmul.f32 %v484, %v480
      %v488 = vld [vmem:[%s2] sm:$0xff]
      %490 = vset.pattern.permute.xlu0 0
      %491 = vperm.xlu0 %490, %v488
      %v492 = vpop.permute.xlu0 %491
      %v494 = vadd.f32 %v486, %v492
      %v495 = vadd.f32 %v487, %v492
      %v496 = vmax.f32 %v494, 0.0
      %v497 = vmax.f32 %v495, 0.0
      %v498 = vld [vmem:[%s3] sm:$0xf]
      %v499 = vld [vmem:[%s3 + $0x4] sm:$0xf]
      %v500 = vld [vmem:[%s3 + $0x8] sm:$0xf]
      %v501 = vld [vmem:[%s3 + $0xc] sm:$0xf]
      %v502 = vpack.c.bf16 %v496, %v496
      %v503 = vpack.c.bf16 %v497, %v497
      %v508 = vunpack.c.l.b16 %v498
      %v509 = vunpack.c.l.b16 %v499
      %v510 = vunpack.c.l.b16 %v500
      %v511 = vunpack.c.l.b16 %v501
      %v512 = vpack.c.b16 %v509, %v508
      %v513 = vpack.c.b16 %v511, %v510
      %vm514 = vcmask 64512
      %v516 = vsel %vm514, %v512, 0
      %v519 = vsel %vm514, %v513, 0
      %vm521 = vcmask 1043456
      %v523 = vsel %vm521, %v502, 0
      %v526 = vsel %vm521, %v503, 0
      %528 = vmatprep.subr.bf16.mxu0 %v526
      %529 = vmatpush1.bf16.msra.mxu0 %v523
      %530 = vmatprep.subr.bf16.mxu0 0
      %531 = vmatpush1.bf16.msra.mxu0 0
      %532 = vmatprep.subr.bf16.mxu0 0
      %533 = vmatpush1.bf16.msra.mxu0 0
      %534 = vmatprep.subr.bf16.mxu0 0
      %535 = vmatpush1.bf16.msra.mxu0 0
      %536 = vmatprep.subr.bf16.mxu0 0
      %537 = vmatpush1.bf16.msra.mxu0 0
      %538 = vmatprep.subr.bf16.mxu0 0
      %539 = vmatpush1.bf16.msra.mxu0 0
      %540 = vmatprep.subr.bf16.mxu0 0
      %541 = vmatpush1.bf16.msra.mxu0 0
      %542 = vmatprep.subr.bf16.mxu0 0
      %543 = vmatpush1.bf16.msra.mxu0 0
      %544 = vmatprep.subr.bf16.mxu0 0
      %545 = vmatpush1.bf16.msra.mxu0 0
      %546 = vmatprep.subr.bf16.mxu0 0
      %547 = vmatpush1.bf16.msra.mxu0 0
      %548 = vmatprep.subr.bf16.mxu0 0
      %549 = vmatpush1.bf16.msra.mxu0 0
      %550 = vmatprep.subr.bf16.mxu0 0
      %551 = vmatpush1.bf16.msra.mxu0 0
      %552 = vmatprep.subr.bf16.mxu0 0
      %553 = vmatpush1.bf16.msra.mxu0 0
      %554 = vmatprep.subr.bf16.mxu0 0
      %555 = vmatpush1.bf16.msra.mxu0 0
      %556 = vmatprep.subr.bf16.mxu0 0
      %557 = vmatpush1.bf16.msra.mxu0 0
      %558 = vmatprep.subr.bf16.mxu0 0
      %559 = vmatpush1.bf16.msra.mxu0 0
      %560 = vmatprep.mubr.bf16.mxu0 0
      %561 = vmatmul.mubr.bf16.gmra.mrb[0].mxu0 %v516
      %v562 = vpop.f32.mrb[0].mxu0
      %v563 = vadd.f32 0.0, %v562
      %v564 = vpop.f32.mrb[0].mxu0
      %v565 = vadd.f32 0.0, %v564
      %v566 = vpop.f32.mrb[0].mxu0
      %v567 = vadd.f32 0.0, %v566
      %v568 = vpop.f32.mrb[0].mxu0
      %v569 = vadd.f32 0.0, %v568
      %570 = vmatprep.mubr.bf16.mxu0 0
      %571 = vmatmul.mubr.bf16.gmra.mrb[0].mxu0 %v519
      %v572 = vpop.f32.mrb[0].mxu0
      %v573 = vadd.f32 0.0, %v572
      %v574 = vpop.f32.mrb[0].mxu0
      %v575 = vadd.f32 0.0, %v574
      %v576 = vpop.f32.mrb[0].mxu0
      %v577 = vadd.f32 0.0, %v576
      %v578 = vpop.f32.mrb[0].mxu0
      %v579 = vadd.f32 0.0, %v578
      %580 = vdwg.mxu0
      %v581 = vadd.f32 %v563, %v565
      %582 = vadd.xlane.f32.xlu0 %v581
      %v583 = vpop.xlane.xlu0 %582
      %v584 = vadd.f32 %v567, %v569
      %585 = vadd.xlane.f32.xlu0 %v584
      %v586 = vpop.xlane.xlu0 %585
      %v587 = vadd.f32 %v573, %v575
      %588 = vadd.xlane.f32.xlu0 %v587
      %v589 = vpop.xlane.xlu0 %588
      %v590 = vadd.f32 %v577, %v579
      %591 = vadd.xlane.f32.xlu0 %v590
      %v592 = vpop.xlane.xlu0 %591
      %vm593 = vcmask 7168
      %594 = vst.msk [vmem:[%s466] sm:$0xff] %vm593, %v583
      %595 = vst.msk [vmem:[%s466 + $0x8] sm:$0xff] %vm593, %v586
      %596 = vst.msk [vmem:[%s466 + $0x10] sm:$0xff] %vm593, %v589
      %597 = vst.msk [vmem:[%s466 + $0x18] sm:$0xff] %vm593, %v592
      %v598 = vmul.f32 %v563, %v563
      %v599 = vmul.f32 %v565, %v565
      %v600 = vmul.f32 %v567, %v567
      %v601 = vmul.f32 %v569, %v569
      %v602 = vmul.f32 %v573, %v573
      %v603 = vmul.f32 %v575, %v575
      %v604 = vmul.f32 %v577, %v577
      %v605 = vmul.f32 %v579, %v579
      %v606 = vadd.f32 %v598, %v599
      %607 = vadd.xlane.f32.xlu0 %v606
      %v608 = vpop.xlane.xlu0 %607
      %v609 = vadd.f32 %v600, %v601
      %610 = vadd.xlane.f32.xlu0 %v609
      %v611 = vpop.xlane.xlu0 %610
      %v612 = vadd.f32 %v602, %v603
      %613 = vadd.xlane.f32.xlu0 %v612
      %v614 = vpop.xlane.xlu0 %613
      %v615 = vadd.f32 %v604, %v605
      %616 = vadd.xlane.f32.xlu0 %v615
      %v617 = vpop.xlane.xlu0 %616
      %vm618 = vcmask 15368
      %619 = vst.msk [vmem:[%s466] sm:$0xff] %vm618, %v608
      %620 = vst.msk [vmem:[%s466 + $0x8] sm:$0xff] %vm618, %v611
      %621 = vst.msk [vmem:[%s466 + $0x10] sm:$0xff] %vm618, %v614
      %622 = vst.msk [vmem:[%s466 + $0x18] sm:$0xff] %vm618, %v617
      %v623 = vpack.c.bf16 %v567, %v563
      %v624 = vpack.c.bf16 %v569, %v565
      %v625 = vpack.c.bf16 %v577, %v573
      %v626 = vpack.c.bf16 %v579, %v575
      %v631 = vunpack.c.l.b16 %v623
      %v632 = vunpack.c.l.b16 %v624
      %v633 = vunpack.c.h.b16 %v623
      %v634 = vunpack.c.h.b16 %v624
      %v635 = vunpack.c.l.b16 %v625
      %v636 = vunpack.c.l.b16 %v626
      %v637 = vunpack.c.h.b16 %v625
      %v638 = vunpack.c.h.b16 %v626
      %v639 = vpack.c.b16 %v632, %v631
      %v640 = vpack.c.b16 %v634, %v633
      %v641 = vpack.c.b16 %v636, %v635
      %v642 = vpack.c.b16 %v638, %v637
      %647 = vst [vmem:[%s446] sm:$0xff] %v639
      %648 = vst [vmem:[%s446 + $0x8] sm:$0xff] %v640
      %649 = vst [vmem:[%s446 + $0x10] sm:$0xff] %v641
      %650 = vst [vmem:[%s446 + $0x18] sm:$0xff] %v642
      %v651 = vld [vmem:[%s5] sm:$0xf]
      %v652 = vld [vmem:[%s5 + $0x4] sm:$0xf]
      %v653 = vld [vmem:[%s5 + $0x8] sm:$0xf]
      %v654 = vld [vmem:[%s5 + $0xc] sm:$0xf]
      %v655 = vld [vmem:[%s436] sm:$0xff]
      %v657 = vcombine.high %v655, %v655
      %v659 = vpack.c.bf16 %v655, %v655
      %v660 = vpack.c.bf16 %v657, %v657
      %v665 = vunpack.c.l.b16 %v651
      %v666 = vunpack.c.l.b16 %v652
      %v667 = vunpack.c.l.b16 %v653
      %v668 = vunpack.c.l.b16 %v654
      %v669 = vpack.c.b16 %v666, %v665
      %v670 = vpack.c.b16 %v668, %v667
      %vm671 = vcmask 31744
      %v673 = vsel %vm671, %v669, 0
      %v676 = vsel %vm671, %v670, 0
      %vm678 = vcmask 1041408
      %v680 = vsel %vm678, %v659, 0
      %v683 = vsel %vm678, %v660, 0
      %685 = vmatprep.subr.bf16.mxu0 %v683
      %686 = vmatpush1.bf16.msra.mxu0 %v680
      %687 = vmatprep.subr.bf16.mxu0 0
      %688 = vmatpush1.bf16.msra.mxu0 0
      %689 = vmatprep.subr.bf16.mxu0 0
      %690 = vmatpush1.bf16.msra.mxu0 0
      %691 = vmatprep.subr.bf16.mxu0 0
      %692 = vmatpush1.bf16.msra.mxu0 0
      %693 = vmatprep.subr.bf16.mxu0 0
      %694 = vmatpush1.bf16.msra.mxu0 0
      %695 = vmatprep.subr.bf16.mxu0 0
      %696 = vmatpush1.bf16.msra.mxu0 0
      %697 = vmatprep.subr.bf16.mxu0 0
      %698 = vmatpush1.bf16.msra.mxu0 0
      %699 = vmatprep.subr.bf16.mxu0 0
      %700 = vmatpush1.bf16.msra.mxu0 0
      %701 = vmatprep.subr.bf16.mxu0 0
      %702 = vmatpush1.bf16.msra.mxu0 0
      %703 = vmatprep.subr.bf16.mxu0 0
      %704 = vmatpush1.bf16.msra.mxu0 0
      %705 = vmatprep.subr.bf16.mxu0 0
      %706 = vmatpush1.bf16.msra.mxu0 0
      %707 = vmatprep.subr.bf16.mxu0 0
      %708 = vmatpush1.bf16.msra.mxu0 0
      %709 = vmatprep.subr.bf16.mxu0 0
      %710 = vmatpush1.bf16.msra.mxu0 0
      %711 = vmatprep.subr.bf16.mxu0 0
      %712 = vmatpush1.bf16.msra.mxu0 0
      %713 = vmatprep.subr.bf16.mxu0 0
      %714 = vmatpush1.bf16.msra.mxu0 0
      %715 = vmatprep.subr.bf16.mxu0 0
      %716 = vmatpush1.bf16.msra.mxu0 0
      %717 = vmatprep.mubr.bf16.mxu0 0
      %718 = vmatmul.mubr.bf16.gmra.mrb[0].mxu0 %v673
      %v719 = vpop.f32.mrb[0].mxu0
      %v720 = vadd.f32 0.0, %v719
      %v721 = vpop.f32.mrb[0].mxu0
      %v722 = vadd.f32 0.0, %v721
      %v723 = vpop.f32.mrb[0].mxu0
      %v724 = vadd.f32 0.0, %v723
      %v725 = vpop.f32.mrb[0].mxu0
      %v726 = vadd.f32 0.0, %v725
      %727 = vmatprep.mubr.bf16.mxu0 0
      %728 = vmatmul.mubr.bf16.gmra.mrb[0].mxu0 %v676
      %v729 = vpop.f32.mrb[0].mxu0
      %v730 = vadd.f32 0.0, %v729
      %v731 = vpop.f32.mrb[0].mxu0
      %v732 = vadd.f32 0.0, %v731
      %v733 = vpop.f32.mrb[0].mxu0
      %v734 = vadd.f32 0.0, %v733
      %v735 = vpop.f32.mrb[0].mxu0
      %v736 = vadd.f32 0.0, %v735
      %737 = vdwg.mxu0
      %v738 = vadd.f32 %v720, %v722
      %739 = vadd.xlane.f32.xlu0 %v738
      %v740 = vpop.xlane.xlu0 %739
      %v741 = vadd.f32 %v724, %v726
      %742 = vadd.xlane.f32.xlu0 %v741
      %v743 = vpop.xlane.xlu0 %742
      %v744 = vadd.f32 %v730, %v732
      %745 = vadd.xlane.f32.xlu0 %v744
      %v746 = vpop.xlane.xlu0 %745
      %v747 = vadd.f32 %v734, %v736
      %748 = vadd.xlane.f32.xlu0 %v747
      %v749 = vpop.xlane.xlu0 %748
      %750 = vst.msk [vmem:[%s475] sm:$0xff] %vm593, %v740
      %751 = vst.msk [vmem:[%s475 + $0x8] sm:$0xff] %vm593, %v743
      %752 = vst.msk [vmem:[%s475 + $0x10] sm:$0xff] %vm593, %v746
      %753 = vst.msk [vmem:[%s475 + $0x18] sm:$0xff] %vm593, %v749
      %v754 = vmul.f32 %v720, %v720
      %v755 = vmul.f32 %v722, %v722
      %v756 = vmul.f32 %v724, %v724
      %v757 = vmul.f32 %v726, %v726
      %v758 = vmul.f32 %v730, %v730
      %v759 = vmul.f32 %v732, %v732
      %v760 = vmul.f32 %v734, %v734
      %v761 = vmul.f32 %v736, %v736
      %v762 = vadd.f32 %v754, %v755
      %763 = vadd.xlane.f32.xlu0 %v762
      %v764 = vpop.xlane.xlu0 %763
      %v765 = vadd.f32 %v756, %v757
      %766 = vadd.xlane.f32.xlu0 %v765
      %v767 = vpop.xlane.xlu0 %766
      %v768 = vadd.f32 %v758, %v759
      %769 = vadd.xlane.f32.xlu0 %v768
      %v770 = vpop.xlane.xlu0 %769
      %v771 = vadd.f32 %v760, %v761
      %772 = vadd.xlane.f32.xlu0 %v771
      %v773 = vpop.xlane.xlu0 %772
      %774 = vst.msk [vmem:[%s475] sm:$0xff] %vm618, %v764
      %775 = vst.msk [vmem:[%s475 + $0x8] sm:$0xff] %vm618, %v767
      %776 = vst.msk [vmem:[%s475 + $0x10] sm:$0xff] %vm618, %v770
      %777 = vst.msk [vmem:[%s475 + $0x18] sm:$0xff] %vm618, %v773
      %v778 = vpack.c.bf16 %v724, %v720
      %v779 = vpack.c.bf16 %v726, %v722
      %v780 = vpack.c.bf16 %v734, %v730
      %v781 = vpack.c.bf16 %v736, %v732
      %v786 = vunpack.c.l.b16 %v778
      %v787 = vunpack.c.l.b16 %v779
      %v788 = vunpack.c.h.b16 %v778
      %v789 = vunpack.c.h.b16 %v779
      %v790 = vunpack.c.l.b16 %v780
      %v791 = vunpack.c.l.b16 %v781
      %v792 = vunpack.c.h.b16 %v780
      %v793 = vunpack.c.h.b16 %v781
      %v794 = vpack.c.b16 %v787, %v786
      %v795 = vpack.c.b16 %v789, %v788
      %v796 = vpack.c.b16 %v791, %v790
      %v797 = vpack.c.b16 %v793, %v792
      %802 = vst [vmem:[%s456] sm:$0xff] %v794
      %803 = vst [vmem:[%s456 + $0x8] sm:$0xff] %v795
      %804 = vst [vmem:[%s456 + $0x10] sm:$0xff] %v796
      %805 = vst [vmem:[%s456 + $0x18] sm:$0xff] %v797
      %s806 = smul.u32 2, %s26
      %p807 = scmp.lt.s32.totalorder %s25, 1
      %s808 = scalar_select %p807, %s25, 1
      %p809 = scmp.lt.s32.totalorder %s806, 1
      %s810 = scalar_select %p809, %s806, 1
      %s811 = smul.addr %s808, 8
      %s812 = sadd.s32 %s810, %s811
      %s813 = smul.addr %s812, 4
      %s814 = scalar_lea.vmem %s6, %s813
      %s815 = smul.u32 2, %s26
      %p816 = scmp.lt.s32.totalorder %s25, 1
      %s817 = scalar_select %p816, %s25, 1
      %p818 = scmp.lt.s32.totalorder %s815, 1
      %s819 = scalar_select %p818, %s815, 1
      %s820 = smul.addr %s817, 8
      %s821 = sadd.s32 %s819, %s820
      %s822 = smul.addr %s821, 4
      %s823 = scalar_lea.vmem %s7, %s822
      %p824 = scmp.lt.s32.totalorder %s25, 1
      %s825 = scalar_select %p824, %s25, 1
      %p826 = scmp.lt.s32.totalorder %s26, 0
      %s827 = scalar_select %p826, %s26, 0
      %s828 = smul.addr %s827, 4
      %s829 = smul.addr %s825, 4
      %s830 = sadd.s32 %s828, %s829
      %s831 = smul.addr %s830, 8
      %s832 = scalar_lea.vmem %s8, %s831
      %p833 = scmp.lt.s32.totalorder %s25, 1
      %s834 = scalar_select %p833, %s25, 1
      %p835 = scmp.lt.s32.totalorder %s26, 0
      %s836 = scalar_select %p835, %s26, 0
      %s837 = smul.addr %s836, 4
      %s838 = smul.addr %s834, 4
      %s839 = sadd.s32 %s837, %s838
      %s840 = smul.addr %s839, 8
      %s841 = scalar_lea.vmem %s9, %s840
      // Predicated region
      $region45: #{deep_block_forward.6} parent=43 // pred_check
        %p842 = pneg %p193
      $region46: #{deep_block_forward.6} parent=43 // pred_check_branch
        %844 = sbr.rel (%p842) target = $region48
      $region47: #{deep_block_forward.6} parent=43 // pred_region
        %s845 = smul.u32 2, %s26
      $region48: #{deep_block_forward.6} parent=43 // pred_fallthru
        _
      // Predicated region
      $region49: #{deep_block_forward.6} parent=43 // pred_check
        %p846 = pneg %p221
      $region50: #{deep_block_forward.6} parent=43 // pred_check_branch
        %848 = sbr.rel (%p846) target = $region52
      $region51: #{deep_block_forward.6} parent=43 // pred_region
        %s849 = smul.u32 2, %s26
      $region52: #{deep_block_forward.6} parent=43 // pred_fallthru
        _
      // Predicated region
      $region53: #{deep_block_forward.6} parent=43 // pred_check
        %p850 = pneg %p249
      $region54: #{deep_block_forward.6} parent=43 // pred_check_branch
        %852 = sbr.rel (%p850) target = $region56
      $region55: #{deep_block_forward.6} parent=43 // pred_region
        _
      $region56: #{deep_block_forward.6} parent=43 // pred_fallthru
        _
      // Predicated region
      $region57: #{deep_block_forward.6} parent=43 // pred_check
        %p853 = pneg %p277
      $region58: #{deep_block_forward.6} parent=43 // pred_check_branch
        %855 = sbr.rel (%p853) target = $region60
      $region59: #{deep_block_forward.6} parent=43 // pred_region
        _
      $region60: #{deep_block_forward.6} parent=43 // pred_fallthru
        _
    $region44: #{deep_block_forward.6} parent=5 // pred_fallthru
      _
    %p856 = scmp.le.s32.totalorder 2, %s16
    // Predicated region
    $region61: #{deep_block_forward.6} parent=5 // pred_check
      %p857 = pneg %p856
    $region62: #{deep_block_forward.6} parent=5 // pred_check_branch
      %859 = sbr.rel (%p857) target = $region64
    $region63: #{deep_block_forward.6} parent=5 // pred_region
      %s860 = ssub.s32 %s16, 2
      // Predicated region
      $region65: #{deep_block_forward.6} parent=63 // pred_check
        %p861 = pneg %p199
      $region66: #{deep_block_forward.6} parent=63 // pred_check_branch
        %863 = sbr.rel (%p861) target = $region68
      $region67: #{deep_block_forward.6} parent=63 // pred_region
        %s864 = smul.u32 2, %s28
        %p865 = scmp.lt.s32.totalorder %s27, 1
        %s866 = scalar_select %p865, %s27, 1
        %p867 = scmp.lt.s32.totalorder %s864, 1
        %s868 = scalar_select %p867, %s864, 1
        %s869 = smul.addr %s866, 8
        %s870 = sadd.s32 %s868, %s869
        %s871 = smul.addr %s870, 4
        %s872 = scalar_lea.vmem %s6, %s871
      $region68: #{deep_block_forward.6} parent=63 // pred_fallthru
        _
      // Predicated region
      $region69: #{deep_block_forward.6} parent=63 // pred_check
        %p873 = pneg %p227
      $region70: #{deep_block_forward.6} parent=63 // pred_check_branch
        %875 = sbr.rel (%p873) target = $region72
      $region71: #{deep_block_forward.6} parent=63 // pred_region
        %s876 = smul.u32 2, %s28
        %p877 = scmp.lt.s32.totalorder %s27, 1
        %s878 = scalar_select %p877, %s27, 1
        %p879 = scmp.lt.s32.totalorder %s876, 1
        %s880 = scalar_select %p879, %s876, 1
        %s881 = smul.addr %s878, 8
        %s882 = sadd.s32 %s880, %s881
        %s883 = smul.addr %s882, 4
        %s884 = scalar_lea.vmem %s7, %s883
      $region72: #{deep_block_forward.6} parent=63 // pred_fallthru
        _
      // Predicated region
      $region73: #{deep_block_forward.6} parent=63 // pred_check
        %p885 = pneg %p255
      $region74: #{deep_block_forward.6} parent=63 // pred_check_branch
        %887 = sbr.rel (%p885) target = $region76
      $region75: #{deep_block_forward.6} parent=63 // pred_region
        %p888 = scmp.lt.s32.totalorder %s27, 1
        %s889 = scalar_select %p888, %s27, 1
        %p890 = scmp.lt.s32.totalorder %s28, 0
        %s891 = scalar_select %p890, %s28, 0
        %s892 = smul.addr %s891, 4
        %s893 = smul.addr %s889, 4
        %s894 = sadd.s32 %s892, %s893
        %s895 = smul.addr %s894, 8
        %s896 = scalar_lea.vmem %s8, %s895
      $region76: #{deep_block_forward.6} parent=63 // pred_fallthru
        _
      // Predicated region
      $region77: #{deep_block_forward.6} parent=63 // pred_check
        %p897 = pneg %p283
      $region78: #{deep_block_forward.6} parent=63 // pred_check_branch
        %899 = sbr.rel (%p897) target = $region80
      $region79: #{deep_block_forward.6} parent=63 // pred_region
        %p900 = scmp.lt.s32.totalorder %s27, 1
        %s901 = scalar_select %p900, %s27, 1
        %p902 = scmp.lt.s32.totalorder %s28, 0
        %s903 = scalar_select %p902, %s28, 0
        %s904 = smul.addr %s903, 4
        %s905 = smul.addr %s901, 4
        %s906 = sadd.s32 %s904, %s905
        %s907 = smul.addr %s906, 8
        %s908 = scalar_lea.vmem %s9, %s907
      $region80: #{deep_block_forward.6} parent=63 // pred_fallthru
        _
    $region64: #{deep_block_forward.6} parent=5 // pred_fallthru
      _
  $region6: #{deep_block_forward.6} parent=0 // loop_footer
    %s20 = sadd.s32 1, %s16
  $region7: #{deep_block_forward.6} parent=0 // loop_footer_branch
    %15 = sbr.rel target = $region3
  $region8: #{deep_block_forward.6} parent=0 // loop_exit
    _

// kernel: deep_block_forward.7
$region0: #{deep_block_forward.7}
  #allocation0 [shape = 'u32[]', space=smem, size = 0x4, offset = 0x4, fixed_abs, tag = 'smem constant byte address 0x4 - core index']
  #allocation1 [shape = 'u32[144,128]{1,0:T(1,128)}', space=vmem, size = 0x12000, scoped, tag = 'internal scratch']
  %s0 = inlined_call_operand.vmem [shape: bf16[2,32,256], index: 0, kind: input, shape index: {}]
  %s1 = inlined_call_operand.vmem [shape: bf16[2,32,256], index: 1, kind: input, shape index: {}]
  %s2 = inlined_call_operand.vmem [shape: f32[32,1], index: 2, kind: input, shape index: {}]
  %s3 = inlined_call_operand.vmem [shape: f32[32,1], index: 3, kind: input, shape index: {}]
  %s4 = inlined_call_operand.vmem [shape: f32[32,1], index: 4, kind: input, shape index: {}]
  %s5 = inlined_call_operand.vmem [shape: f32[32,1], index: 5, kind: input, shape index: {}]
  %s6 = inlined_call_operand.vmem [shape: f32[2,32,256], index: 6, kind: output, shape index: {}]
  %s7 = sld [smem:[#allocation0]]
  $region57: #{deep_block_forward.7} parent=0
    _
  %s9 = ssub.s32 1, %s7
  %s10 = scalar_select 0, %s9, %s7
  loop: start=0, step=1, limit=4
  $region2: #{deep_block_forward.7} parent=0 // loop_pre_header
    _
  $region3: #{deep_block_forward.7} parent=0 // loop_header
    %s12 = sphi 0, %s16
    %p13 = scmp.ge.s32.totalorder %s12, 4
    %s19 = sphi 0, %s31
    %s20 = sphi 0, %s27
    %s21 = sphi 0, %s19
    %s22 = sphi 0, %s20
    %s23 = sphi 0, %s21
    %s24 = sphi 0, %s22
    %s36 = sphi 0, %s38
    %s39 = sphi 0, %s36
    %s40 = sphi 0, %s39
    %s56 = sphi 0, %s40
    %s64 = sphi 0, %s66
    %s67 = sphi 0, %s64
    %s68 = sphi 0, %s67
    %s84 = sphi 0, %s68
    %s88 = sphi 0, %s88
    %s90 = sphi 0, %s88
    %s91 = sphi 0, %s90
    %s105 = sphi 0, %s91
    %s109 = sphi 0, %s109
    %s111 = sphi 0, %s109
    %s112 = sphi 0, %s111
    %s126 = sphi 0, %s112
    %s130 = sphi 0, %s130
    %s132 = sphi 0, %s130
    %s133 = sphi 0, %s132
    %s147 = sphi 0, %s133
    %s151 = sphi 0, %s151
    %s153 = sphi 0, %s151
    %s154 = sphi 0, %s153
    %s168 = sphi 0, %s154
    %s176 = sphi 0, %s178
    %s179 = sphi 0, %s176
    %s180 = sphi 0, %s179
    %s196 = sphi 0, %s180
  $region4: #{deep_block_forward.7} parent=0 // loop_header_branch
    %15 = sbr.rel (%p13) target = $region8
  $region5: #{deep_block_forward.7} parent=0 // loop_body
    %s17 = ssub.s32 %s12, 1
    %s18 = ssub.s32 %s12, 2
    %s25 = sadd.s32 1, %s20
    %p26 = scmp.ge.s32.totalorder %s25, 1
    %s27 = scalar_select %p26, 0, %s25
    %s28 = sadd.s32 1, %s19
    %s29 = scalar_select %p26, %s28, %s19
    %p30 = scmp.ge.s32.totalorder %s29, 2
    %s31 = scalar_select %p30, 0, %s29
    %s32 = ssub.s32 %s19, %s31
    %s33 = ssub.s32 %s20, %s27
    %s34 = sor.u32 %s32, %s33
    %p35 = scmp.eq.s32.totalorder %s34, 0
    %s37 = sadd.s32 %s36, 1
    %s38 = scalar_select %p35, %s36, %s37
    %p41 = pneg %p35
    %p42 = scmp.eq.s32.totalorder %s12, 1
    %p43 = por %p41, %p42
    %p44 = scmp.ne.s32.totalorder %s36, %s39
    %p45 = scmp.eq.s32.totalorder %s12, 0
    %p46 = por %p44, %p45
    %p47 = scmp.ne.s32.totalorder %s36, %s39
    %p48 = scmp.eq.s32.totalorder %s17, 1
    %p49 = por %p47, %p48
    %p50 = scmp.ne.s32.totalorder %s39, %s40
    %p51 = scmp.eq.s32.totalorder %s17, 0
    %p52 = por %p50, %p51
    %p53 = scmp.ne.s32.totalorder %s39, %s40
    %p54 = scmp.eq.s32.totalorder %s18, 1
    %p55 = por %p53, %p54
    %p57 = scmp.ne.s32.totalorder %s40, %s56
    %p58 = scmp.eq.s32.totalorder %s18, 0
    %p59 = por %p57, %p58
    %s60 = ssub.s32 %s19, %s31
    %s61 = ssub.s32 %s20, %s27
    %s62 = sor.u32 %s60, %s61
    %p63 = scmp.eq.s32.totalorder %s62, 0
    %s65 = sadd.s32 %s64, 1
    %s66 = scalar_select %p63, %s64, %s65
    %p69 = pneg %p63
    %p70 = scmp.eq.s32.totalorder %s12, 1
    %p71 = por %p69, %p70
    %p72 = scmp.ne.s32.totalorder %s64, %s67
    %p73 = scmp.eq.s32.totalorder %s12, 0
    %p74 = por %p72, %p73
    %p75 = scmp.ne.s32.totalorder %s64, %s67
    %p76 = scmp.eq.s32.totalorder %s17, 1
    %p77 = por %p75, %p76
    %p78 = scmp.ne.s32.totalorder %s67, %s68
    %p79 = scmp.eq.s32.totalorder %s17, 0
    %p80 = por %p78, %p79
    %p81 = scmp.ne.s32.totalorder %s67, %s68
    %p82 = scmp.eq.s32.totalorder %s18, 1
    %p83 = por %p81, %p82
    %p85 = scmp.ne.s32.totalorder %s68, %s84
    %p86 = scmp.eq.s32.totalorder %s18, 0
    %p87 = por %p85, %p86
    %s89 = sadd.s32 %s88, 1
    %p92 = scmp.eq.s32.totalorder %s12, 1
    %p93 = scmp.ne.s32.totalorder %s88, %s90
    %p94 = scmp.eq.s32.totalorder %s12, 0
    %p95 = por %p93, %p94
    %p96 = scmp.ne.s32.totalorder %s88, %s90
    %p97 = scmp.eq.s32.totalorder %s17, 1
    %p98 = por %p96, %p97
    %p99 = scmp.ne.s32.totalorder %s90, %s91
    %p100 = scmp.eq.s32.totalorder %s17, 0
    %p101 = por %p99, %p100
    %p102 = scmp.ne.s32.totalorder %s90, %s91
    %p103 = scmp.eq.s32.totalorder %s18, 1
    %p104 = por %p102, %p103
    %p106 = scmp.ne.s32.totalorder %s91, %s105
    %p107 = scmp.eq.s32.totalorder %s18, 0
    %p108 = por %p106, %p107
    %s110 = sadd.s32 %s109, 1
    %p113 = scmp.eq.s32.totalorder %s12, 1
    %p114 = scmp.ne.s32.totalorder %s109, %s111
    %p115 = scmp.eq.s32.totalorder %s12, 0
    %p116 = por %p114, %p115
    %p117 = scmp.ne.s32.totalorder %s109, %s111
    %p118 = scmp.eq.s32.totalorder %s17, 1
    %p119 = por %p117, %p118
    %p120 = scmp.ne.s32.totalorder %s111, %s112
    %p121 = scmp.eq.s32.totalorder %s17, 0
    %p122 = por %p120, %p121
    %p123 = scmp.ne.s32.totalorder %s111, %s112
    %p124 = scmp.eq.s32.totalorder %s18, 1
    %p125 = por %p123, %p124
    %p127 = scmp.ne.s32.totalorder %s112, %s126
    %p128 = scmp.eq.s32.totalorder %s18, 0
    %p129 = por %p127, %p128
    %s131 = sadd.s32 %s130, 1
    %p134 = scmp.eq.s32.totalorder %s12, 1
    %p135 = scmp.ne.s32.totalorder %s130, %s132
    %p136 = scmp.eq.s32.totalorder %s12, 0
    %p137 = por %p135, %p136
    %p138 = scmp.ne.s32.totalorder %s130, %s132
    %p139 = scmp.eq.s32.totalorder %s17, 1
    %p140 = por %p138, %p139
    %p141 = scmp.ne.s32.totalorder %s132, %s133
    %p142 = scmp.eq.s32.totalorder %s17, 0
    %p143 = por %p141, %p142
    %p144 = scmp.ne.s32.totalorder %s132, %s133
    %p145 = scmp.eq.s32.totalorder %s18, 1
    %p146 = por %p144, %p145
    %p148 = scmp.ne.s32.totalorder %s133, %s147
    %p149 = scmp.eq.s32.totalorder %s18, 0
    %p150 = por %p148, %p149
    %s152 = sadd.s32 %s151, 1
    %p155 = scmp.eq.s32.totalorder %s12, 1
    %p156 = scmp.ne.s32.totalorder %s151, %s153
    %p157 = scmp.eq.s32.totalorder %s12, 0
    %p158 = por %p156, %p157
    %p159 = scmp.ne.s32.totalorder %s151, %s153
    %p160 = scmp.eq.s32.totalorder %s17, 1
    %p161 = por %p159, %p160
    %p162 = scmp.ne.s32.totalorder %s153, %s154
    %p163 = scmp.eq.s32.totalorder %s17, 0
    %p164 = por %p162, %p163
    %p165 = scmp.ne.s32.totalorder %s153, %s154
    %p166 = scmp.eq.s32.totalorder %s18, 1
    %p167 = por %p165, %p166
    %p169 = scmp.ne.s32.totalorder %s154, %s168
    %p170 = scmp.eq.s32.totalorder %s18, 0
    %p171 = por %p169, %p170
    %s172 = ssub.s32 %s19, %s31
    %s173 = ssub.s32 %s20, %s27
    %s174 = sor.u32 %s172, %s173
    %p175 = scmp.eq.s32.totalorder %s174, 0
    %s177 = sadd.s32 %s176, 1
    %s178 = scalar_select %p175, %s176, %s177
    %p181 = pneg %p175
    %p182 = scmp.eq.s32.totalorder %s12, 1
    %p183 = por %p181, %p182
    %p184 = scmp.ne.s32.totalorder %s176, %s179
    %p185 = scmp.eq.s32.totalorder %s12, 0
    %p186 = por %p184, %p185
    %p187 = scmp.ne.s32.totalorder %s176, %s179
    %p188 = scmp.eq.s32.totalorder %s17, 1
    %p189 = por %p187, %p188
    %p190 = scmp.ne.s32.totalorder %s179, %s180
    %p191 = scmp.eq.s32.totalorder %s17, 0
    %p192 = por %p190, %p191
    %p193 = scmp.ne.s32.totalorder %s179, %s180
    %p194 = scmp.eq.s32.totalorder %s18, 1
    %p195 = por %p193, %p194
    %p197 = scmp.ne.s32.totalorder %s180, %s196
    %p198 = scmp.eq.s32.totalorder %s18, 0
    %p199 = por %p197, %p198
    %p200 = scmp.le.s32.totalorder 1, %s12
    %p201 = scmp.lt.s32.totalorder %s12, 3
    %p202 = pnand %p200, %p201
    %p203 = pneg %p202
    // Predicated region
    $region9: #{deep_block_forward.7} parent=5 // pred_check
      _
    $region10: #{deep_block_forward.7} parent=5 // pred_check_branch
      %205 = sbr.rel (%p202) target = $region12
    $region11: #{deep_block_forward.7} parent=5 // pred_region
      %s206 = ssub.s32 %s12, 1
      // Predicated region
      $region13: #{deep_block_forward.7} parent=11 // pred_check
        %p207 = pneg %p101
      $region14: #{deep_block_forward.7} parent=11 // pred_check_branch
        %209 = sbr.rel (%p207) target = $region16
      $region15: #{deep_block_forward.7} parent=11 // pred_region
        _
      $region16: #{deep_block_forward.7} parent=11 // pred_fallthru
        _
      // Predicated region
      $region17: #{deep_block_forward.7} parent=11 // pred_check
        %p210 = pneg %p122
      $region18: #{deep_block_forward.7} parent=11 // pred_check_branch
        %212 = sbr.rel (%p210) target = $region20
      $region19: #{deep_block_forward.7} parent=11 // pred_region
        _
      $region20: #{deep_block_forward.7} parent=11 // pred_fallthru
        _
      // Predicated region
      $region21: #{deep_block_forward.7} parent=11 // pred_check
        %p213 = pneg %p143
      $region22: #{deep_block_forward.7} parent=11 // pred_check_branch
        %215 = sbr.rel (%p213) target = $region24
      $region23: #{deep_block_forward.7} parent=11 // pred_region
        _
      $region24: #{deep_block_forward.7} parent=11 // pred_fallthru
        _
      // Predicated region
      $region25: #{deep_block_forward.7} parent=11 // pred_check
        %p216 = pneg %p164
      $region26: #{deep_block_forward.7} parent=11 // pred_check_branch
        %218 = sbr.rel (%p216) target = $region28
      $region27: #{deep_block_forward.7} parent=11 // pred_region
        _
      $region28: #{deep_block_forward.7} parent=11 // pred_fallthru
        _
    $region12: #{deep_block_forward.7} parent=5 // pred_fallthru
      _
    %p219 = scmp.lt.s32.totalorder %s12, 2
    // Predicated region
    $region29: #{deep_block_forward.7} parent=5 // pred_check
      %p220 = pneg %p219
    $region30: #{deep_block_forward.7} parent=5 // pred_check_branch
      %222 = sbr.rel (%p220) target = $region32
    $region31: #{deep_block_forward.7} parent=5 // pred_region
      // Predicated region
      $region33: #{deep_block_forward.7} parent=31 // pred_check
        %p223 = pneg %p46
      $region34: #{deep_block_forward.7} parent=31 // pred_check_branch
        %225 = sbr.rel (%p223) target = $region36
      $region35: #{deep_block_forward.7} parent=31 // pred_region
        %s226 = smul.u32 2, %s20
        %p227 = scmp.lt.s32.totalorder %s19, 1
        %s228 = scalar_select %p227, %s19, 1
        %p229 = scmp.lt.s32.totalorder %s226, 1
        %s230 = scalar_select %p229, %s226, 1
        %s231 = smul.addr %s228, 8
        %s232 = sadd.s32 %s230, %s231
        %s233 = smul.addr %s232, 4
        %s234 = scalar_lea.vmem %s0, %s233
        %s235 = smul.u32 2, %s20
      $region36: #{deep_block_forward.7} parent=31 // pred_fallthru
        _
      // Predicated region
      $region37: #{deep_block_forward.7} parent=31 // pred_check
        %p236 = pneg %p74
      $region38: #{deep_block_forward.7} parent=31 // pred_check_branch
        %238 = sbr.rel (%p236) target = $region40
      $region39: #{deep_block_forward.7} parent=31 // pred_region
        %s239 = smul.u32 2, %s20
        %p240 = scmp.lt.s32.totalorder %s19, 1
        %s241 = scalar_select %p240, %s19, 1
        %p242 = scmp.lt.s32.totalorder %s239, 1
        %s243 = scalar_select %p242, %s239, 1
        %s244 = smul.addr %s241, 8
        %s245 = sadd.s32 %s243, %s244
        %s246 = smul.addr %s245, 4
        %s247 = scalar_lea.vmem %s1, %s246
        %s248 = smul.u32 2, %s20
      $region40: #{deep_block_forward.7} parent=31 // pred_fallthru
        _
    $region32: #{deep_block_forward.7} parent=5 // pred_fallthru
      _
    %p249 = scmp.le.s32.totalorder 1, %s12
    %p250 = scmp.lt.s32.totalorder %s12, 3
    %p251 = pnand %p249, %p250
    %p252 = pneg %p251
    // Predicated region
    $region41: #{deep_block_forward.7} parent=5 // pred_check
      _
    $region42: #{deep_block_forward.7} parent=5 // pred_check_branch
      %254 = sbr.rel (%p251) target = $region44
    $region43: #{deep_block_forward.7} parent=5 // pred_region
      %s255 = ssub.s32 %s12, 1
      %s256 = smul.u32 2, %s22
      %p257 = scmp.lt.s32.totalorder %s21, 1
      %s258 = scalar_select %p257, %s21, 1
      %p259 = scmp.lt.s32.totalorder %s256, 1
      %s260 = scalar_select %p259, %s256, 1
      %s261 = smul.addr %s258, 8
      %s262 = sadd.s32 %s260, %s261
      %s263 = smul.addr %s262, 4
      %s264 = scalar_lea.vmem %s0, %s263
      %p265 = pneg %p52
      %p266 = pneg %p49
      %s267 = smul.u32 2, %s22
      %p268 = scmp.lt.s32.totalorder %s21, 1
      %s269 = scalar_select %p268, %s21, 1
      %p270 = scmp.lt.s32.totalorder %s267, 1
      %s271 = scalar_select %p270, %s267, 1
      %s272 = smul.addr %s269, 8
      %s273 = sadd.s32 %s271, %s272
      %s274 = smul.addr %s273, 4
      %s275 = scalar_lea.vmem %s1, %s274
      %p276 = pneg %p80
      %p277 = pneg %p77
      %p278 = pneg %p101
      %p279 = pneg %p98
      %p280 = pneg %p122
      %p281 = pneg %p119
      %p282 = pneg %p143
      %p283 = pneg %p140
      %p284 = pneg %p164
      %p285 = pneg %p161
      %p286 = pneg %p192
      %p287 = pneg %p189
      %s288 = smul.u32 2, %s22
      %p289 = scmp.lt.s32.totalorder %s21, 1
      %s290 = scalar_select %p289, %s21, 1
      %p291 = scmp.lt.s32.totalorder %s288, 1
      %s292 = scalar_select %p291, %s288, 1
      %s293 = smul.addr %s290, 8
      %s294 = sadd.s32 %s292, %s293
      %s295 = smul.addr %s294, 8
      %s296 = scalar_lea.vmem %s6, %s295
      %s297 = smul.u32 2, %s22
      %p298 = scmp.lt.s32.totalorder %s21, 1
      %s299 = scalar_select %p298, %s21, 1
      %p300 = scmp.lt.s32.totalorder %s297, 1
      %s301 = scalar_select %p300, %s297, 1
      %s302 = smul.addr %s299, 8
      %s303 = sadd.s32 %s301, %s302
      %s304 = smul.addr %s303, 4
      %s305 = scalar_lea.vmem %s0, %s304
      %s306 = smul.u32 2, %s22
      %s307 = smul.u32 2, %s22
      %p308 = scmp.lt.s32.totalorder %s21, 1
      %s309 = scalar_select %p308, %s21, 1
      %p310 = scmp.lt.s32.totalorder %s307, 1
      %s311 = scalar_select %p310, %s307, 1
      %s312 = smul.addr %s309, 8
      %s313 = sadd.s32 %s311, %s312
      %s314 = smul.addr %s313, 4
      %s315 = scalar_lea.vmem %s1, %s314
      %s316 = smul.u32 2, %s22
      %s317 = smul.u32 2, %s22
      %p318 = scmp.lt.s32.totalorder %s21, 1
      %s319 = scalar_select %p318, %s21, 1
      %p320 = scmp.lt.s32.totalorder %s317, 1
      %s321 = scalar_select %p320, %s317, 1
      %s322 = smul.addr %s319, 8
      %s323 = sadd.s32 %s321, %s322
      %s324 = smul.addr %s323, 8
      %s325 = scalar_lea.vmem %s6, %s324
      %s326 = smul.u32 2, %s22
      %v327 = vld [vmem:[%s2] sm:$0xff]
      %v328 = vld [vmem:[%s2 + $0x8] sm:$0xff]
      %v329 = vld [vmem:[%s2 + $0x10] sm:$0xff]
      %v330 = vld [vmem:[%s2 + $0x18] sm:$0xff]
      %v331 = vld [vmem:[%s305] sm:$0xff]
      %v332 = vld [vmem:[%s305 + $0x8] sm:$0xff]
      %v333 = vld [vmem:[%s305 + $0x10] sm:$0xff]
      %v334 = vld [vmem:[%s305 + $0x18] sm:$0xff]
      %v335 = vunpack.c.l.bf16 %v331
      %v336 = vunpack.c.h.bf16 %v331
      %v337 = vunpack.c.l.bf16 %v332
      %v338 = vunpack.c.h.bf16 %v332
      %v339 = vunpack.c.l.bf16 %v333
      %v340 = vunpack.c.h.bf16 %v333
      %v341 = vunpack.c.l.bf16 %v334
      %v342 = vunpack.c.h.bf16 %v334
      %344 = vset.pattern.permute.xlu0 0
      %345 = vperm.xlu0 %344, %v327
      %v346 = vpop.permute.xlu0 %345
      %349 = vset.pattern.permute.xlu0 0
      %350 = vperm.xlu0 %349, %v328
      %v351 = vpop.permute.xlu0 %350
      %354 = vset.pattern.permute.xlu0 0
      %355 = vperm.xlu0 %354, %v329
      %v356 = vpop.permute.xlu0 %355
      %359 = vset.pattern.permute.xlu0 0
      %360 = vperm.xlu0 %359, %v330
      %v361 = vpop.permute.xlu0 %360
      %v363 = vmul.f32 %v346, %v335
      %v364 = vmul.f32 %v346, %v336
      %v365 = vmul.f32 %v351, %v337
      %v366 = vmul.f32 %v351, %v338
      %v367 = vmul.f32 %v356, %v339
      %v368 = vmul.f32 %v356, %v340
      %v369 = vmul.f32 %v361, %v341
      %v370 = vmul.f32 %v361, %v342
      %v371 = vld [vmem:[%s3] sm:$0xff]
      %v372 = vld [vmem:[%s3 + $0x8] sm:$0xff]
      %v373 = vld [vmem:[%s3 + $0x10] sm:$0xff]
      %v374 = vld [vmem:[%s3 + $0x18] sm:$0xff]
      %376 = vset.pattern.permute.xlu0 0
      %377 = vperm.xlu0 %376, %v371
      %v378 = vpop.permute.xlu0 %377
      %381 = vset.pattern.permute.xlu0 0
      %382 = vperm.xlu0 %381, %v372
      %v383 = vpop.permute.xlu0 %382
      %386 = vset.pattern.permute.xlu0 0
      %387 = vperm.xlu0 %386, %v373
      %v388 = vpop.permute.xlu0 %387
      %391 = vset.pattern.permute.xlu0 0
      %392 = vperm.xlu0 %391, %v374
      %v393 = vpop.permute.xlu0 %392
      %v395 = vadd.f32 %v363, %v378
      %v396 = vadd.f32 %v364, %v378
      %v397 = vadd.f32 %v365, %v383
      %v398 = vadd.f32 %v366, %v383
      %v399 = vadd.f32 %v367, %v388
      %v400 = vadd.f32 %v368, %v388
      %v401 = vadd.f32 %v369, %v393
      %v402 = vadd.f32 %v370, %v393
      %v403 = vld [vmem:[%s4] sm:$0xff]
      %v404 = vld [vmem:[%s4 + $0x8] sm:$0xff]
      %v405 = vld [vmem:[%s4 + $0x10] sm:$0xff]
      %v406 = vld [vmem:[%s4 + $0x18] sm:$0xff]
      %v407 = vld [vmem:[%s315] sm:$0xff]
      %v408 = vld [vmem:[%s315 + $0x8] sm:$0xff]
      %v409 = vld [vmem:[%s315 + $0x10] sm:$0xff]
      %v410 = vld [vmem:[%s315 + $0x18] sm:$0xff]
      %v411 = vunpack.c.l.bf16 %v407
      %v412 = vunpack.c.h.bf16 %v407
      %v413 = vunpack.c.l.bf16 %v408
      %v414 = vunpack.c.h.bf16 %v408
      %v415 = vunpack.c.l.bf16 %v409
      %v416 = vunpack.c.h.bf16 %v409
      %v417 = vunpack.c.l.bf16 %v410
      %v418 = vunpack.c.h.bf16 %v410
      %420 = vset.pattern.permute.xlu0 0
      %421 = vperm.xlu0 %420, %v403
      %v422 = vpop.permute.xlu0 %421
      %425 = vset.pattern.permute.xlu0 0
      %426 = vperm.xlu0 %425, %v404
      %v427 = vpop.permute.xlu0 %426
      %430 = vset.pattern.permute.xlu0 0
      %431 = vperm.xlu0 %430, %v405
      %v432 = vpop.permute.xlu0 %431
      %435 = vset.pattern.permute.xlu0 0
      %436 = vperm.xlu0 %435, %v406
      %v437 = vpop.permute.xlu0 %436
      %v439 = vmul.f32 %v422, %v411
      %v440 = vmul.f32 %v422, %v412
      %v441 = vmul.f32 %v427, %v413
      %v442 = vmul.f32 %v427, %v414
      %v443 = vmul.f32 %v432, %v415
      %v444 = vmul.f32 %v432, %v416
      %v445 = vmul.f32 %v437, %v417
      %v446 = vmul.f32 %v437, %v418
      %v447 = vld [vmem:[%s5] sm:$0xff]
      %v448 = vld [vmem:[%s5 + $0x8] sm:$0xff]
      %v449 = vld [vmem:[%s5 + $0x10] sm:$0xff]
      %v450 = vld [vmem:[%s5 + $0x18] sm:$0xff]
      %452 = vset.pattern.permute.xlu0 0
      %453 = vperm.xlu0 %452, %v447
      %v454 = vpop.permute.xlu0 %453
      %457 = vset.pattern.permute.xlu0 0
      %458 = vperm.xlu0 %457, %v448
      %v459 = vpop.permute.xlu0 %458
      %462 = vset.pattern.permute.xlu0 0
      %463 = vperm.xlu0 %462, %v449
      %v464 = vpop.permute.xlu0 %463
      %467 = vset.pattern.permute.xlu0 0
      %468 = vperm.xlu0 %467, %v450
      %v469 = vpop.permute.xlu0 %468
      %v471 = vadd.f32 %v439, %v454
      %v472 = vadd.f32 %v440, %v454
      %v473 = vadd.f32 %v441, %v459
      %v474 = vadd.f32 %v442, %v459
      %v475 = vadd.f32 %v443, %v464
      %v476 = vadd.f32 %v444, %v464
      %v477 = vadd.f32 %v445, %v469
      %v478 = vadd.f32 %v446, %v469
      %v479 = vadd.f32 %v395, %v471
      %v480 = vadd.f32 %v396, %v472
      %v481 = vadd.f32 %v397, %v473
      %v482 = vadd.f32 %v398, %v474
      %v483 = vadd.f32 %v399, %v475
      %v484 = vadd.f32 %v400, %v476
      %v485 = vadd.f32 %v401, %v477
      %v486 = vadd.f32 %v402, %v478
      %v487 = vmax.f32 %v479, 0.0
      %v488 = vmax.f32 %v480, 0.0
      %v489 = vmax.f32 %v481, 0.0
      %v490 = vmax.f32 %v482, 0.0
      %v491 = vmax.f32 %v483, 0.0
      %v492 = vmax.f32 %v484, 0.0
      %v493 = vmax.f32 %v485, 0.0
      %v494 = vmax.f32 %v486, 0.0
      %495 = vst [vmem:[%s325] sm:$0xff] %v487
      %496 = vst [vmem:[%s325 + $0x8] sm:$0xff] %v488
      %497 = vst [vmem:[%s325 + $0x10] sm:$0xff] %v489
      %498 = vst [vmem:[%s325 + $0x18] sm:$0xff] %v490
      %499 = vst [vmem:[%s325 + $0x20] sm:$0xff] %v491
      %500 = vst [vmem:[%s325 + $0x28] sm:$0xff] %v492
      %501 = vst [vmem:[%s325 + $0x30] sm:$0xff] %v493
      %502 = vst [vmem:[%s325 + $0x38] sm:$0xff] %v494
      %s503 = smul.u32 2, %s22
      %p504 = scmp.lt.s32.totalorder %s21, 1
      %s505 = scalar_select %p504, %s21, 1
      %p506 = scmp.lt.s32.totalorder %s503, 1
      %s507 = scalar_select %p506, %s503, 1
      %s508 = smul.addr %s505, 8
      %s509 = sadd.s32 %s507, %s508
      %s510 = smul.addr %s509, 8
      %s511 = scalar_lea.vmem %s6, %s510
      // Predicated region
      $region45: #{deep_block_forward.7} parent=43 // pred_check
        %p512 = pneg %p189
      $region46: #{deep_block_forward.7} parent=43 // pred_check_branch
        %514 = sbr.rel (%p512) target = $region48
      $region47: #{deep_block_forward.7} parent=43 // pred_region
        %s515 = smul.u32 2, %s22
      $region48: #{deep_block_forward.7} parent=43 // pred_fallthru
        _
    $region44: #{deep_block_forward.7} parent=5 // pred_fallthru
      _
    %p516 = scmp.le.s32.totalorder 2, %s12
    // Predicated region
    $region49: #{deep_block_forward.7} parent=5 // pred_check
      %p517 = pneg %p516
    $region50: #{deep_block_forward.7} parent=5 // pred_check_branch
      %519 = sbr.rel (%p517) target = $region52
    $region51: #{deep_block_forward.7} parent=5 // pred_region
      %s520 = ssub.s32 %s12, 2
      // Predicated region
      $region53: #{deep_block_forward.7} parent=51 // pred_check
        %p521 = pneg %p195
      $region54: #{deep_block_forward.7} parent=51 // pred_check_branch
        %523 = sbr.rel (%p521) target = $region56
      $region55: #{deep_block_forward.7} parent=51 // pred_region
        %s524 = smul.u32 2, %s24
        %p525 = scmp.lt.s32.totalorder %s23, 1
        %s526 = scalar_select %p525, %s23, 1
        %p527 = scmp.lt.s32.totalorder %s524, 1
        %s528 = scalar_select %p527, %s524, 1
        %s529 = smul.addr %s526, 8
        %s530 = sadd.s32 %s528, %s529
        %s531 = smul.addr %s530, 8
        %s532 = scalar_lea.vmem %s6, %s531
      $region56: #{deep_block_forward.7} parent=51 // pred_fallthru
        _
    $region52: #{deep_block_forward.7} parent=5 // pred_fallthru
      _
  $region6: #{deep_block_forward.7} parent=0 // loop_footer
    %s16 = sadd.s32 1, %s12
  $region7: #{deep_block_forward.7} parent=0 // loop_footer_branch
    %11 = sbr.rel target = $region3
  $region8: #{deep_block_forward.7} parent=0 // loop_exit
    _

</llo_original>
